<compile_context>
chip_gen: v7x
topology: tpu7x:2x2x1
jax: 0.10.0
libtpu: 0.0.40
codegen_flags: <defaults>
</compile_context>

<pallas_src>
import numpy as np
import jax
import jax.numpy as jnp
from jax import lax
from jax.experimental import pallas as pl
from jax.experimental.pallas import tpu as pltpu

LANE = 128            # hidden / output feature dims padded to full lane width
DST_COL = LANE - 1    # padded lane holding the folded dst-attention score


# ----------------------------- Pallas kernel ------------------------------ #
def gatnet_kernel(x_ref, mask_ref, invdeg_ref,
                  w1_ref, w2_ref, w3_ref, prm_ref,
                  out_ref):
    x = x_ref[...]                                     # (BLK, F)
    neg_mask = mask_ref[...].astype(jnp.float32)       # (BLK, BLK) additive mask
    inv_deg = invdeg_ref[...]                          # (BLK, 1)

    # stacked tiny parameters: rows = [as1, b1, as2, b2, b3, 0, 0, 0]
    as1 = prm_ref[0:1, :]
    b1 = prm_ref[1:2, :]
    as2 = prm_ref[2:3, :]
    b2 = prm_ref[3:4, :]
    b3 = prm_ref[4:5, :]

    cdims = (((1,), (1,)), ((), ()))   # contract feature (lane) axis

    def gat_layer(h_in, w, a_src, bias):
        # linear transform (MXU); lane DST_COL of w carries W @ a_dst, so the
        # dst scores come out of the same matmul for free.
        h = jnp.dot(h_in, w, preferred_element_type=jnp.float32)       # (BLK, 128)
        s_dst = h[:, DST_COL:DST_COL + 1]                               # (BLK, 1)
        # src scores as a ROW off the MXU -> no XLU reduction, no transpose.
        s_src = lax.dot_general(a_src, h, cdims,
                                preferred_element_type=jnp.float32)     # (1, BLK)
        e = s_dst + s_src                                               # (BLK, BLK)
        e = jnp.maximum(e, 0.2 * e)        # LeakyReLU(0.2)
        e = e + neg_mask                   # mask non-edges / cross-graph pairs
        e = e - jnp.max(e, axis=-1, keepdims=True)
        p = jnp.exp(e)                     # masked entries underflow to exactly 0
        # softmax normalization + 'mean' aggregation folded into one exact
        # per-row scale (tiny (BLK,1) divide — not worth the approx recip).
        row_scale = inv_deg / jnp.sum(p, axis=-1, keepdims=True)        # (BLK, 1)
        # weighted message passing: bf16 MXU operands, f32 accumulation.
        msg = jnp.dot(p.astype(jnp.bfloat16), h.astype(jnp.bfloat16),
                      preferred_element_type=jnp.float32)               # (BLK, 128)
        return msg * row_scale + bias

    h1 = jnp.maximum(gat_layer(x, w1_ref[...], as1, b1), 0.0)
    h2 = jnp.maximum(gat_layer(h1, w2_ref[...], as2, b2), 0.0)
    y = jnp.dot(h2, w3_ref[...], preferred_element_type=jnp.float32) + b3
    out_ref[...] = jnp.maximum(y, 0.0)                                  # (BLK, 128)


# ------------------------------- wrapper ----------------------------------- #
def gatnet_forward(x_flat, neg_mask, inv_deg, params, *, block_nodes=128):
    """x_flat: (TOTAL_N, F) node features, graphs stacked along rows.
    neg_mask: (TOTAL_N, block_nodes) bf16 additive mask (0 edge / -1e30 else),
              block-diagonal per super-block of graphs.
    inv_deg : (TOTAL_N, 1) reciprocal incoming degree ('mean' aggregation)."""
    TOTAL_N, F = x_flat.shape
    BLK = block_nodes
    assert TOTAL_N % BLK == 0, "pad the graph batch to a multiple of block_nodes"
    nblk = TOTAL_N // BLK

    H = params["w1"].shape[1]
    O = params["w3"].shape[1]
    Hp = LANE

    def pad2(a, rows, cols):
        out = jnp.zeros((rows, cols), jnp.float32)
        return out.at[: a.shape[0], : a.shape[1]].set(a)

    # zero-padded weights; fold W @ a_dst into lane DST_COL (rows >= H of
    # w2p / w3p MUST remain exactly zero so the extra lane stays contained).
    w1p = pad2(params["w1"], F, Hp)
    w1p = w1p.at[:F, DST_COL].set(params["w1"] @ params["ad1"][0])
    w2p = pad2(params["w2"], Hp, Hp)
    w2p = w2p.at[:H, DST_COL].set(params["w2"] @ params["ad2"][0])
    w3p = pad2(params["w3"], Hp, LANE)

    # stack the remaining tiny (1, H) params into one (8, 128) tile
    prm = jnp.zeros((8, LANE), jnp.float32)
    prm = prm.at[0, :H].set(params["as1"][0])
    prm = prm.at[1, :H].set(params["b1"][0])
    prm = prm.at[2, :H].set(params["as2"][0])
    prm = prm.at[3, :H].set(params["b2"][0])
    prm = prm.at[4, :O].set(params["b3"][0])

    args = [x_flat, neg_mask, inv_deg, w1p, w2p, w3p, prm]

    in_specs = [
        pl.BlockSpec((BLK, F), lambda b: (b, 0)),        # x rows per super-block
        pl.BlockSpec((BLK, BLK), lambda b: (b, 0)),      # bf16 additive mask
        pl.BlockSpec((BLK, 1), lambda b: (b, 0)),        # inv_deg
        pl.BlockSpec((F, Hp), lambda b: (0, 0)),         # w1p (resident)
        pl.BlockSpec((Hp, Hp), lambda b: (0, 0)),        # w2p
        pl.BlockSpec((Hp, LANE), lambda b: (0, 0)),      # w3p
        pl.BlockSpec((8, LANE), lambda b: (0, 0)),       # stacked tiny params
    ]
    out_specs = pl.BlockSpec((BLK, LANE), lambda b: (b, 0))

    # advisory cost estimate for the XLA scheduler
    flops_per_blk = (2 * BLK * F * Hp + 2 * BLK * Hp * Hp + 2 * BLK * Hp * LANE
                     + 2 * (2 * Hp * BLK)              # s_src row matmuls (x2)
                     + 2 * (2 * BLK * BLK * Hp))       # p @ h message matmuls (x2)
    transcendentals = nblk * 2 * BLK * BLK             # exp
    bytes_accessed = (4 * (x_flat.size + inv_deg.size
                           + w1p.size + w2p.size + w3p.size + prm.size
                           + TOTAL_N * LANE)
                      + 2 * neg_mask.size)

    out = pl.pallas_call(
        gatnet_kernel,
        out_shape=jax.ShapeDtypeStruct((TOTAL_N, LANE), jnp.float32),
        grid=(nblk,),
        in_specs=in_specs,
        out_specs=out_specs,
        cost_estimate=pl.CostEstimate(flops=nblk * flops_per_blk,
                                      transcendentals=transcendentals,
                                      bytes_accessed=bytes_accessed),
        compiler_params=pltpu.CompilerParams(
            dimension_semantics=("parallel",),          # row blocks independent
            vmem_limit_bytes=32 * 1024 * 1024),
    )(*args)
    return out[:, :O]   # slice lane-dense slab back to the real out_dim


# -------------------------- pure-JAX reference ----------------------------- #
def _gat_layer_ref(x, adj, deg, w, a_src, a_dst, b):
    h = x @ w
    s_src = jnp.sum(h * a_src, axis=-1, keepdims=True)
    s_dst = jnp.sum(h * a_dst, axis=-1, keepdims=True)
    e = s_dst + s_src.T
    e = jnp.where(e > 0, e, 0.2 * e)
    e = jnp.where(adj > 0, e, -1e30)
    e = e - e.max(-1, keepdims=True)
    p = jnp.exp(e) * adj
    alpha = p / p.sum(-1, keepdims=True)
    return alpha @ h / deg + b


def gatnet_ref(x, adj, deg, p):
    h1 = jax.nn.relu(_gat_layer_ref(x, adj, deg, p["w1"], p["as1"], p["ad1"], p["b1"]))
    h2 = jax.nn.relu(_gat_layer_ref(h1, adj, deg, p["w2"], p["as2"], p["ad2"], p["b2"]))
    return jax.nn.relu(h2 @ p["w3"] + p["b3"])


# --------------------------------- main ------------------------------------ #
if __name__ == "__main__":
    N = 16                      # nodes per graph
    input_dim = 4
    hidden_dim = 32
    output_dim = 8
    GRAPHS = 16                 # batched graphs
    GRAPHS_PER_BLOCK = 8        # 8 graphs x 16 nodes = 128 rows fills the MXU M dim
    BLK_N = GRAPHS_PER_BLOCK * N
    TOTAL_N = GRAPHS * N

    key = jax.random.PRNGKey(0)
    ks = jax.random.split(key, 12)

    def glorot(k, shape):
        fan_in, fan_out = shape
        lim = float(np.sqrt(6.0 / (fan_in + fan_out)))
        return jax.random.uniform(k, shape, jnp.float32, -lim, lim)

    params = {
        "w1": glorot(ks[0], (input_dim, hidden_dim)),
        "as1": 0.1 * jax.random.normal(ks[1], (1, hidden_dim), jnp.float32),
        "ad1": 0.1 * jax.random.normal(ks[2], (1, hidden_dim), jnp.float32),
        "b1": jnp.zeros((1, hidden_dim), jnp.float32),
        "w2": glorot(ks[3], (hidden_dim, hidden_dim)),
        "as2": 0.1 * jax.random.normal(ks[4], (1, hidden_dim), jnp.float32),
        "ad2": 0.1 * jax.random.normal(ks[5], (1, hidden_dim), jnp.float32),
        "b2": jnp.zeros((1, hidden_dim), jnp.float32),
        "w3": glorot(ks[6], (hidden_dim, output_dim)),
        "b3": 0.01 * jax.random.normal(ks[7], (1, output_dim), jnp.float32),
    }

    # node features for every graph in the batch
    x_all = jax.random.normal(ks[8], (GRAPHS, N, input_dim), jnp.float32)

    # deterministic edge_index (2, E): bidirectional ring + a few chords
    src, dst = [], []
    for i in range(N):
        src += [i, i]
        dst += [(i + 1) % N, (i - 1) % N]
        if i % 4 == 0:
            src.append(i)
            dst.append((i + N // 2) % N)
    edge_index = np.stack([np.array(src), np.array(dst)])  # (2, E)

    # dense adjacency (edge j->i => adj[i, j] = 1) plus self loops.  Self
    # loops guarantee every row has >= 1 edge (softmax/degree never zero).
    adj_np = np.zeros((N, N), dtype=np.float32)
    adj_np[edge_index[1], edge_index[0]] = 1.0
    np.fill_diagonal(adj_np, 1.0)
    adj = jnp.asarray(adj_np)
    deg = jnp.sum(adj, axis=1, keepdims=True)

    # ---- batched driver inputs: stacked features, block-diagonal mask ---- #
    x_flat = x_all.reshape(TOTAL_N, input_dim)
    per_graph_mask = np.where(adj_np > 0, 0.0, -1e30).astype(np.float32)
    mask_np = np.full((TOTAL_N, BLK_N), -1e30, dtype=np.float32)
    for g in range(GRAPHS):
        r0 = g * N
        c0 = (g % GRAPHS_PER_BLOCK) * N
        mask_np[r0:r0 + N, c0:c0 + N] = per_graph_mask
    neg_mask = jnp.asarray(mask_np).astype(jnp.bfloat16)     # halved mask DMA
    inv_deg = jnp.tile(1.0 / deg, (GRAPHS, 1))                # (TOTAL_N, 1)

    out = gatnet_forward(x_flat, neg_mask, inv_deg, params, block_nodes=BLK_N)
    out = jax.block_until_ready(out)

    ref = jnp.concatenate([gatnet_ref(x_all[g], adj, deg, params)
                           for g in range(GRAPHS)], axis=0)
    # tolerance reflects bf16 MXU operands on the two message matmuls
    # (all softmax / elementwise math and accumulation remain f32)
    np.testing.assert_allclose(np.asarray(out), np.asarray(ref),
                               rtol=2e-2, atol=5e-3)

    print("KERNEL_OK")
</pallas_src>

<mosaic_0001>
module attributes {stable_mosaic.version = 11 : i64} {
  func.func @gatnet_kernel(%arg0: i32, %arg1: memref<128x4xf32, #tpu.memory_space<vmem>>, %arg2: memref<128x128xbf16, #tpu.memory_space<vmem>>, %arg3: memref<128x1xf32, #tpu.memory_space<vmem>>, %arg4: memref<4x128xf32, #tpu.memory_space<vmem>>, %arg5: memref<128x128xf32, #tpu.memory_space<vmem>>, %arg6: memref<128x128xf32, #tpu.memory_space<vmem>>, %arg7: memref<8x128xf32, #tpu.memory_space<vmem>>, %arg8: memref<128x128xf32, #tpu.memory_space<vmem>>) attributes {dimension_semantics = [#tpu.dimension_semantics<parallel>], iteration_bounds = array<i64: 2>, scalar_prefetch = 0 : i64, scratch_operands = 0 : i64, tpu.core_type = #tpu.core_type<tc>, window_params = [{transform_indices = @transform_0, window_bounds = array<i64: 128, 4>}, {transform_indices = @transform_1, window_bounds = array<i64: 128, 128>}, {transform_indices = @transform_2, window_bounds = array<i64: 128, 1>}, {pipeline_mode = #tpu.pipeline_mode<synchronous>, transform_indices = @transform_3, window_bounds = array<i64: 4, 128>}, {pipeline_mode = #tpu.pipeline_mode<synchronous>, transform_indices = @transform_4, window_bounds = array<i64: 128, 128>}, {pipeline_mode = #tpu.pipeline_mode<synchronous>, transform_indices = @transform_5, window_bounds = array<i64: 128, 128>}, {pipeline_mode = #tpu.pipeline_mode<synchronous>, transform_indices = @transform_6, window_bounds = array<i64: 8, 128>}, {transform_indices = @transform_7, window_bounds = array<i64: 128, 128>}]} {
    %c0 = arith.constant 0 : index
    %c0_0 = arith.constant 0 : index
    %0 = vector.load %arg1[%c0, %c0_0] : memref<128x4xf32, #tpu.memory_space<vmem>>, vector<128x4xf32>
    %c0_1 = arith.constant 0 : index
    %c0_2 = arith.constant 0 : index
    %1 = vector.load %arg2[%c0_1, %c0_2] : memref<128x128xbf16, #tpu.memory_space<vmem>>, vector<128x128xbf16>
    %2 = arith.extf %1 : vector<128x128xbf16> to vector<128x128xf32>
    %c0_3 = arith.constant 0 : index
    %c0_4 = arith.constant 0 : index
    %3 = vector.load %arg3[%c0_3, %c0_4] : memref<128x1xf32, #tpu.memory_space<vmem>>, vector<128x1xf32>
    %c0_5 = arith.constant 0 : index
    %c0_6 = arith.constant 0 : index
    %4 = vector.load %arg7[%c0_5, %c0_6] : memref<8x128xf32, #tpu.memory_space<vmem>>, vector<1x128xf32>
    %c1 = arith.constant 1 : index
    %c0_7 = arith.constant 0 : index
    %5 = vector.load %arg7[%c1, %c0_7] : memref<8x128xf32, #tpu.memory_space<vmem>>, vector<1x128xf32>
    %c2 = arith.constant 2 : index
    %c0_8 = arith.constant 0 : index
    %6 = vector.load %arg7[%c2, %c0_8] : memref<8x128xf32, #tpu.memory_space<vmem>>, vector<1x128xf32>
    %c3 = arith.constant 3 : index
    %c0_9 = arith.constant 0 : index
    %7 = vector.load %arg7[%c3, %c0_9] : memref<8x128xf32, #tpu.memory_space<vmem>>, vector<1x128xf32>
    %c4 = arith.constant 4 : index
    %c0_10 = arith.constant 0 : index
    %8 = vector.load %arg7[%c4, %c0_10] : memref<8x128xf32, #tpu.memory_space<vmem>>, vector<1x128xf32>
    %c0_11 = arith.constant 0 : index
    %c0_12 = arith.constant 0 : index
    %9 = vector.load %arg4[%c0_11, %c0_12] : memref<4x128xf32, #tpu.memory_space<vmem>>, vector<4x128xf32>
    %cst = arith.constant dense<0.000000e+00> : vector<128x128xf32>
    %10 = tpu.matmul %0, %9, %cst {dimension_numbers = #tpu.dot_dimension_numbers<[1], [0], [0], [1], [0, 0, 1, 1], [], []>} : vector<128x4xf32>, vector<4x128xf32>, vector<128x128xf32> -> vector<128x128xf32>
    %11 = vector.extract_strided_slice %10 {offsets = [0, 127], sizes = [128, 1], strides = [1, 1]} : vector<128x128xf32> to vector<128x1xf32>
    %cst_13 = arith.constant dense<0.000000e+00> : vector<1x128xf32>
    %12 = tpu.matmul %4, %10, %cst_13 {dimension_numbers = #tpu.dot_dimension_numbers<[1], [1], [0], [0], [0, 0, 1, 0], [], []>} : vector<1x128xf32>, vector<128x128xf32>, vector<1x128xf32> -> vector<1x128xf32>
    %13 = vector.broadcast %11 : vector<128x1xf32> to vector<128x128xf32>
    %14 = vector.broadcast %12 : vector<1x128xf32> to vector<128x128xf32>
    %15 = arith.addf %13, %14 : vector<128x128xf32>
    %cst_14 = arith.constant 2.000000e-01 : f32
    %16 = vector.broadcast %cst_14 : f32 to vector<128x128xf32>
    %17 = arith.mulf %16, %15 : vector<128x128xf32>
    %18 = arith.maximumf %15, %17 : vector<128x128xf32>
    %19 = arith.addf %18, %2 : vector<128x128xf32>
    %cst_15 = arith.constant dense<0xFF800000> : vector<128xf32>
    %20 = vector.multi_reduction <maximumf>, %19, %cst_15 [1] : vector<128x128xf32> to vector<128xf32>
    %21 = vector.shape_cast %20 : vector<128xf32> to vector<128x1xf32>
    %22 = vector.broadcast %21 : vector<128x1xf32> to vector<128x128xf32>
    %23 = arith.subf %19, %22 : vector<128x128xf32>
    %24 = math.exp %23 : vector<128x128xf32>
    %cst_16 = arith.constant dense<0.000000e+00> : vector<128xf32>
    %25 = vector.multi_reduction <add>, %24, %cst_16 [1] : vector<128x128xf32> to vector<128xf32>
    %26 = vector.shape_cast %25 : vector<128xf32> to vector<128x1xf32>
    %27 = arith.divf %3, %26 : vector<128x1xf32>
    %28 = arith.truncf %24 : vector<128x128xf32> to vector<128x128xbf16>
    %29 = arith.truncf %10 : vector<128x128xf32> to vector<128x128xbf16>
    %cst_17 = arith.constant dense<0.000000e+00> : vector<128x128xf32>
    %30 = tpu.matmul %28, %29, %cst_17 {dimension_numbers = #tpu.dot_dimension_numbers<[1], [0], [0], [1], [0, 0, 1, 1], [], []>} : vector<128x128xbf16>, vector<128x128xbf16>, vector<128x128xf32> -> vector<128x128xf32>
    %31 = vector.broadcast %27 : vector<128x1xf32> to vector<128x128xf32>
    %32 = arith.mulf %30, %31 : vector<128x128xf32>
    %33 = vector.broadcast %5 : vector<1x128xf32> to vector<128x128xf32>
    %34 = arith.addf %32, %33 : vector<128x128xf32>
    %cst_18 = arith.constant 0.000000e+00 : f32
    %35 = vector.broadcast %cst_18 : f32 to vector<128x128xf32>
    %36 = arith.maximumf %34, %35 : vector<128x128xf32>
    %c0_19 = arith.constant 0 : index
    %c0_20 = arith.constant 0 : index
    %37 = vector.load %arg5[%c0_19, %c0_20] : memref<128x128xf32, #tpu.memory_space<vmem>>, vector<128x128xf32>
    %cst_21 = arith.constant dense<0.000000e+00> : vector<128x128xf32>
    %38 = tpu.matmul %36, %37, %cst_21 {dimension_numbers = #tpu.dot_dimension_numbers<[1], [0], [0], [1], [0, 0, 1, 1], [], []>} : vector<128x128xf32>, vector<128x128xf32>, vector<128x128xf32> -> vector<128x128xf32>
    %39 = vector.extract_strided_slice %38 {offsets = [0, 127], sizes = [128, 1], strides = [1, 1]} : vector<128x128xf32> to vector<128x1xf32>
    %cst_22 = arith.constant dense<0.000000e+00> : vector<1x128xf32>
    %40 = tpu.matmul %6, %38, %cst_22 {dimension_numbers = #tpu.dot_dimension_numbers<[1], [1], [0], [0], [0, 0, 1, 0], [], []>} : vector<1x128xf32>, vector<128x128xf32>, vector<1x128xf32> -> vector<1x128xf32>
    %41 = vector.broadcast %39 : vector<128x1xf32> to vector<128x128xf32>
    %42 = vector.broadcast %40 : vector<1x128xf32> to vector<128x128xf32>
    %43 = arith.addf %41, %42 : vector<128x128xf32>
    %cst_23 = arith.constant 2.000000e-01 : f32
    %44 = vector.broadcast %cst_23 : f32 to vector<128x128xf32>
    %45 = arith.mulf %44, %43 : vector<128x128xf32>
    %46 = arith.maximumf %43, %45 : vector<128x128xf32>
    %47 = arith.addf %46, %2 : vector<128x128xf32>
    %cst_24 = arith.constant dense<0xFF800000> : vector<128xf32>
    %48 = vector.multi_reduction <maximumf>, %47, %cst_24 [1] : vector<128x128xf32> to vector<128xf32>
    %49 = vector.shape_cast %48 : vector<128xf32> to vector<128x1xf32>
    %50 = vector.broadcast %49 : vector<128x1xf32> to vector<128x128xf32>
    %51 = arith.subf %47, %50 : vector<128x128xf32>
    %52 = math.exp %51 : vector<128x128xf32>
    %cst_25 = arith.constant dense<0.000000e+00> : vector<128xf32>
    %53 = vector.multi_reduction <add>, %52, %cst_25 [1] : vector<128x128xf32> to vector<128xf32>
    %54 = vector.shape_cast %53 : vector<128xf32> to vector<128x1xf32>
    %55 = arith.divf %3, %54 : vector<128x1xf32>
    %56 = arith.truncf %52 : vector<128x128xf32> to vector<128x128xbf16>
    %57 = arith.truncf %38 : vector<128x128xf32> to vector<128x128xbf16>
    %cst_26 = arith.constant dense<0.000000e+00> : vector<128x128xf32>
    %58 = tpu.matmul %56, %57, %cst_26 {dimension_numbers = #tpu.dot_dimension_numbers<[1], [0], [0], [1], [0, 0, 1, 1], [], []>} : vector<128x128xbf16>, vector<128x128xbf16>, vector<128x128xf32> -> vector<128x128xf32>
    %59 = vector.broadcast %55 : vector<128x1xf32> to vector<128x128xf32>
    %60 = arith.mulf %58, %59 : vector<128x128xf32>
    %61 = vector.broadcast %7 : vector<1x128xf32> to vector<128x128xf32>
    %62 = arith.addf %60, %61 : vector<128x128xf32>
    %cst_27 = arith.constant 0.000000e+00 : f32
    %63 = vector.broadcast %cst_27 : f32 to vector<128x128xf32>
    %64 = arith.maximumf %62, %63 : vector<128x128xf32>
    %c0_28 = arith.constant 0 : index
    %c0_29 = arith.constant 0 : index
    %65 = vector.load %arg6[%c0_28, %c0_29] : memref<128x128xf32, #tpu.memory_space<vmem>>, vector<128x128xf32>
    %cst_30 = arith.constant dense<0.000000e+00> : vector<128x128xf32>
    %66 = tpu.matmul %64, %65, %cst_30 {dimension_numbers = #tpu.dot_dimension_numbers<[1], [0], [0], [1], [0, 0, 1, 1], [], []>} : vector<128x128xf32>, vector<128x128xf32>, vector<128x128xf32> -> vector<128x128xf32>
    %67 = vector.broadcast %8 : vector<1x128xf32> to vector<128x128xf32>
    %68 = arith.addf %66, %67 : vector<128x128xf32>
    %cst_31 = arith.constant 0.000000e+00 : f32
    %69 = vector.broadcast %cst_31 : f32 to vector<128x128xf32>
    %70 = arith.maximumf %68, %69 : vector<128x128xf32>
    %c0_32 = arith.constant 0 : index
    %c0_33 = arith.constant 0 : index
    %71 = vector.load %arg8[%c0_32, %c0_33] : memref<128x128xf32, #tpu.memory_space<vmem>>, vector<128x128xf32>
    tpu.vector_store %arg8[%c0_32, %c0_33], %70 {strides = array<i32>} : memref<128x128xf32, #tpu.memory_space<vmem>>, vector<128x128xf32>,
    return
  }
  func.func @transform_0(%arg0: i32) -> (i32, i32) {
    %c0_i32 = arith.constant 0 : i32
    %c0_i32_0 = arith.constant 0 : i32
    return %arg0, %c0_i32 : i32, i32
  }
  func.func @transform_1(%arg0: i32) -> (i32, i32) {
    %c0_i32 = arith.constant 0 : i32
    %c0_i32_0 = arith.constant 0 : i32
    return %arg0, %c0_i32 : i32, i32
  }
  func.func @transform_2(%arg0: i32) -> (i32, i32) {
    %c0_i32 = arith.constant 0 : i32
    %c0_i32_0 = arith.constant 0 : i32
    return %arg0, %c0_i32 : i32, i32
  }
  func.func @transform_3(%arg0: i32) -> (i32, i32) {
    %c0_i32 = arith.constant 0 : i32
    %c0_i32_0 = arith.constant 0 : i32
    %c0_i32_1 = arith.constant 0 : i32
    return %c0_i32, %c0_i32_0 : i32, i32
  }
  func.func @transform_4(%arg0: i32) -> (i32, i32) {
    %c0_i32 = arith.constant 0 : i32
    %c0_i32_0 = arith.constant 0 : i32
    %c0_i32_1 = arith.constant 0 : i32
    return %c0_i32, %c0_i32_0 : i32, i32
  }
  func.func @transform_5(%arg0: i32) -> (i32, i32) {
    %c0_i32 = arith.constant 0 : i32
    %c0_i32_0 = arith.constant 0 : i32
    %c0_i32_1 = arith.constant 0 : i32
    return %c0_i32, %c0_i32_0 : i32, i32
  }
  func.func @transform_6(%arg0: i32) -> (i32, i32) {
    %c0_i32 = arith.constant 0 : i32
    %c0_i32_0 = arith.constant 0 : i32
    %c0_i32_1 = arith.constant 0 : i32
    return %c0_i32, %c0_i32_0 : i32, i32
  }
  func.func @transform_7(%arg0: i32) -> (i32, i32) {
    %c0_i32 = arith.constant 0 : i32
    %c0_i32_0 = arith.constant 0 : i32
    return %arg0, %c0_i32 : i32, i32
  }
}

</mosaic_0001>

<llo_original>
// kernel: tpu_custom_call.1
$region0: #{tpu_custom_call.1}
  #allocation0 [shape = 'u32[]', space=smem, size = 0x4, offset = 0x4, fixed_abs, tag = 'smem constant byte address 0x4 - core index']
  #allocation1 [shape = 'u32[144,128]{1,0:T(1,128)}', space=vmem, size = 0x12000, scoped, tag = 'internal scratch']
  %s0 = inlined_call_operand.vmem [shape: f32[256,4], index: 0, kind: input, shape index: {}]
  %s1 = inlined_call_operand.vmem [shape: bf16[256,128], index: 1, kind: input, shape index: {}]
  %s2 = inlined_call_operand.vmem [shape: f32[256,1], index: 2, kind: input, shape index: {}]
  %s3 = inlined_call_operand.vmem [shape: f32[4,128], index: 3, kind: input, shape index: {}]
  %s4 = inlined_call_operand.vmem [shape: f32[128,128], index: 4, kind: input, shape index: {}]
  %s5 = inlined_call_operand.vmem [shape: f32[128,128], index: 5, kind: input, shape index: {}]
  %s6 = inlined_call_operand.vmem [shape: f32[8,128], index: 6, kind: input, shape index: {}]
  %s7 = inlined_call_operand.hbm [shape: f32[256,128], index: 7, kind: output, shape index: {}]
  %s8 = sld [smem:[#allocation0]]
  $region61: #{tpu_custom_call.1} parent=0
    _
  %s10 = ssub.s32 1, %s8
  %s11 = scalar_select 0, %s10, %s8
  $region1: #{tpu_custom_call.1} parent=0
    #allocation2 [shape = 'u8[131072]{0}', space=vmem, size = 0x20000, scoped, tag = 'output window, operand 0']
    #allocation3 [shape = 's32[2]{0}', space=sflag, size = 0x8, scoped, tag = 'scoped memory for tpu_custom_call.1']
    %12 = vsyncpa [#allocation3], 0
    %s13 = scalar_lea.sflag [#allocation3], 1
    %14 = vsyncpa %s13, 0
    loop: start=0, step=1, limit=4
    $region2: #{tpu_custom_call.1} parent=1 // loop_pre_header
      _
    $region3: #{tpu_custom_call.1} parent=1 // loop_header
      %s16 = sphi 0, %s20
      %p17 = scmp.ge.s32.totalorder %s16, 4
      %s26 = sphi 0, %s28
      %s29 = sphi 0, %s26
      %s30 = sphi 0, %s29
      %s46 = sphi 0, %s30
      %s52 = sphi 0, %s54
      %s55 = sphi 0, %s52
      %s56 = sphi 0, %s55
      %s72 = sphi 0, %s56
      %s78 = sphi 0, %s80
      %s81 = sphi 0, %s78
      %s82 = sphi 0, %s81
      %s98 = sphi 0, %s82
      %s102 = sphi 0, %s102
      %s104 = sphi 0, %s102
      %s105 = sphi 0, %s104
      %s119 = sphi 0, %s105
      %s123 = sphi 0, %s123
      %s125 = sphi 0, %s123
      %s126 = sphi 0, %s125
      %s140 = sphi 0, %s126
      %s144 = sphi 0, %s144
      %s146 = sphi 0, %s144
      %s147 = sphi 0, %s146
      %s161 = sphi 0, %s147
      %s165 = sphi 0, %s165
      %s167 = sphi 0, %s165
      %s168 = sphi 0, %s167
      %s182 = sphi 0, %s168
      %s188 = sphi 0, %s190
      %s191 = sphi 0, %s188
      %s192 = sphi 0, %s191
      %s208 = sphi 0, %s192
    $region4: #{tpu_custom_call.1} parent=1 // loop_header_branch
      %19 = sbr.rel (%p17) target = $region8
    $region5: #{tpu_custom_call.1} parent=1 // loop_body
      %s21 = ssub.s32 %s16, 1
      %s22 = ssub.s32 %s16, 2
      %s23 = sadd.s32 %s16, 1
      %s24 = ssub.s32 %s16, %s23
      %p25 = scmp.eq.s32.totalorder %s24, 0
      %s27 = sadd.s32 %s26, 1
      %s28 = scalar_select %p25, %s26, %s27
      %p31 = pneg %p25
      %p32 = scmp.eq.s32.totalorder %s16, 1
      %p33 = por %p31, %p32
      %p34 = scmp.ne.s32.totalorder %s26, %s29
      %p35 = scmp.eq.s32.totalorder %s16, 0
      %p36 = por %p34, %p35
      %p37 = scmp.ne.s32.totalorder %s26, %s29
      %p38 = scmp.eq.s32.totalorder %s21, 1
      %p39 = por %p37, %p38
      %p40 = scmp.ne.s32.totalorder %s29, %s30
      %p41 = scmp.eq.s32.totalorder %s21, 0
      %p42 = por %p40, %p41
      %p43 = scmp.ne.s32.totalorder %s29, %s30
      %p44 = scmp.eq.s32.totalorder %s22, 1
      %p45 = por %p43, %p44
      %p47 = scmp.ne.s32.totalorder %s30, %s46
      %p48 = scmp.eq.s32.totalorder %s22, 0
      %p49 = por %p47, %p48
      %s50 = ssub.s32 %s16, %s23
      %p51 = scmp.eq.s32.totalorder %s50, 0
      %s53 = sadd.s32 %s52, 1
      %s54 = scalar_select %p51, %s52, %s53
      %p57 = pneg %p51
      %p58 = scmp.eq.s32.totalorder %s16, 1
      %p59 = por %p57, %p58
      %p60 = scmp.ne.s32.totalorder %s52, %s55
      %p61 = scmp.eq.s32.totalorder %s16, 0
      %p62 = por %p60, %p61
      %p63 = scmp.ne.s32.totalorder %s52, %s55
      %p64 = scmp.eq.s32.totalorder %s21, 1
      %p65 = por %p63, %p64
      %p66 = scmp.ne.s32.totalorder %s55, %s56
      %p67 = scmp.eq.s32.totalorder %s21, 0
      %p68 = por %p66, %p67
      %p69 = scmp.ne.s32.totalorder %s55, %s56
      %p70 = scmp.eq.s32.totalorder %s22, 1
      %p71 = por %p69, %p70
      %p73 = scmp.ne.s32.totalorder %s56, %s72
      %p74 = scmp.eq.s32.totalorder %s22, 0
      %p75 = por %p73, %p74
      %s76 = ssub.s32 %s16, %s23
      %p77 = scmp.eq.s32.totalorder %s76, 0
      %s79 = sadd.s32 %s78, 1
      %s80 = scalar_select %p77, %s78, %s79
      %p83 = pneg %p77
      %p84 = scmp.eq.s32.totalorder %s16, 1
      %p85 = por %p83, %p84
      %p86 = scmp.ne.s32.totalorder %s78, %s81
      %p87 = scmp.eq.s32.totalorder %s16, 0
      %p88 = por %p86, %p87
      %p89 = scmp.ne.s32.totalorder %s78, %s81
      %p90 = scmp.eq.s32.totalorder %s21, 1
      %p91 = por %p89, %p90
      %p92 = scmp.ne.s32.totalorder %s81, %s82
      %p93 = scmp.eq.s32.totalorder %s21, 0
      %p94 = por %p92, %p93
      %p95 = scmp.ne.s32.totalorder %s81, %s82
      %p96 = scmp.eq.s32.totalorder %s22, 1
      %p97 = por %p95, %p96
      %p99 = scmp.ne.s32.totalorder %s82, %s98
      %p100 = scmp.eq.s32.totalorder %s22, 0
      %p101 = por %p99, %p100
      %s103 = sadd.s32 %s102, 1
      %p106 = scmp.eq.s32.totalorder %s16, 1
      %p107 = scmp.ne.s32.totalorder %s102, %s104
      %p108 = scmp.eq.s32.totalorder %s16, 0
      %p109 = por %p107, %p108
      %p110 = scmp.ne.s32.totalorder %s102, %s104
      %p111 = scmp.eq.s32.totalorder %s21, 1
      %p112 = por %p110, %p111
      %p113 = scmp.ne.s32.totalorder %s104, %s105
      %p114 = scmp.eq.s32.totalorder %s21, 0
      %p115 = por %p113, %p114
      %p116 = scmp.ne.s32.totalorder %s104, %s105
      %p117 = scmp.eq.s32.totalorder %s22, 1
      %p118 = por %p116, %p117
      %p120 = scmp.ne.s32.totalorder %s105, %s119
      %p121 = scmp.eq.s32.totalorder %s22, 0
      %p122 = por %p120, %p121
      %s124 = sadd.s32 %s123, 1
      %p127 = scmp.eq.s32.totalorder %s16, 1
      %p128 = scmp.ne.s32.totalorder %s123, %s125
      %p129 = scmp.eq.s32.totalorder %s16, 0
      %p130 = por %p128, %p129
      %p131 = scmp.ne.s32.totalorder %s123, %s125
      %p132 = scmp.eq.s32.totalorder %s21, 1
      %p133 = por %p131, %p132
      %p134 = scmp.ne.s32.totalorder %s125, %s126
      %p135 = scmp.eq.s32.totalorder %s21, 0
      %p136 = por %p134, %p135
      %p137 = scmp.ne.s32.totalorder %s125, %s126
      %p138 = scmp.eq.s32.totalorder %s22, 1
      %p139 = por %p137, %p138
      %p141 = scmp.ne.s32.totalorder %s126, %s140
      %p142 = scmp.eq.s32.totalorder %s22, 0
      %p143 = por %p141, %p142
      %s145 = sadd.s32 %s144, 1
      %p148 = scmp.eq.s32.totalorder %s16, 1
      %p149 = scmp.ne.s32.totalorder %s144, %s146
      %p150 = scmp.eq.s32.totalorder %s16, 0
      %p151 = por %p149, %p150
      %p152 = scmp.ne.s32.totalorder %s144, %s146
      %p153 = scmp.eq.s32.totalorder %s21, 1
      %p154 = por %p152, %p153
      %p155 = scmp.ne.s32.totalorder %s146, %s147
      %p156 = scmp.eq.s32.totalorder %s21, 0
      %p157 = por %p155, %p156
      %p158 = scmp.ne.s32.totalorder %s146, %s147
      %p159 = scmp.eq.s32.totalorder %s22, 1
      %p160 = por %p158, %p159
      %p162 = scmp.ne.s32.totalorder %s147, %s161
      %p163 = scmp.eq.s32.totalorder %s22, 0
      %p164 = por %p162, %p163
      %s166 = sadd.s32 %s165, 1
      %p169 = scmp.eq.s32.totalorder %s16, 1
      %p170 = scmp.ne.s32.totalorder %s165, %s167
      %p171 = scmp.eq.s32.totalorder %s16, 0
      %p172 = por %p170, %p171
      %p173 = scmp.ne.s32.totalorder %s165, %s167
      %p174 = scmp.eq.s32.totalorder %s21, 1
      %p175 = por %p173, %p174
      %p176 = scmp.ne.s32.totalorder %s167, %s168
      %p177 = scmp.eq.s32.totalorder %s21, 0
      %p178 = por %p176, %p177
      %p179 = scmp.ne.s32.totalorder %s167, %s168
      %p180 = scmp.eq.s32.totalorder %s22, 1
      %p181 = por %p179, %p180
      %p183 = scmp.ne.s32.totalorder %s168, %s182
      %p184 = scmp.eq.s32.totalorder %s22, 0
      %p185 = por %p183, %p184
      %s186 = ssub.s32 %s16, %s23
      %p187 = scmp.eq.s32.totalorder %s186, 0
      %s189 = sadd.s32 %s188, 1
      %s190 = scalar_select %p187, %s188, %s189
      %p193 = pneg %p187
      %p194 = scmp.eq.s32.totalorder %s16, 1
      %p195 = por %p193, %p194
      %p196 = scmp.ne.s32.totalorder %s188, %s191
      %p197 = scmp.eq.s32.totalorder %s16, 0
      %p198 = por %p196, %p197
      %p199 = scmp.ne.s32.totalorder %s188, %s191
      %p200 = scmp.eq.s32.totalorder %s21, 1
      %p201 = por %p199, %p200
      %p202 = scmp.ne.s32.totalorder %s191, %s192
      %p203 = scmp.eq.s32.totalorder %s21, 0
      %p204 = por %p202, %p203
      %p205 = scmp.ne.s32.totalorder %s191, %s192
      %p206 = scmp.eq.s32.totalorder %s22, 1
      %p207 = por %p205, %p206
      %p209 = scmp.ne.s32.totalorder %s192, %s208
      %p210 = scmp.eq.s32.totalorder %s22, 0
      %p211 = por %p209, %p210
      %p212 = scmp.le.s32.totalorder 1, %s16
      %p213 = scmp.lt.s32.totalorder %s16, 3
      %p214 = pnand %p212, %p213
      %p215 = pneg %p214
      // Predicated region
      $region9: #{tpu_custom_call.1} parent=5 // pred_check
        _
      $region10: #{tpu_custom_call.1} parent=5 // pred_check_branch
        %217 = sbr.rel (%p214) target = $region12
      $region11: #{tpu_custom_call.1} parent=5 // pred_region
        %s218 = ssub.s32 %s16, 1
        // Predicated region
        $region13: #{tpu_custom_call.1} parent=11 // pred_check
          %p219 = pneg %p115
        $region14: #{tpu_custom_call.1} parent=11 // pred_check_branch
          %221 = sbr.rel (%p219) target = $region16
        $region15: #{tpu_custom_call.1} parent=11 // pred_region
          _
        $region16: #{tpu_custom_call.1} parent=11 // pred_fallthru
          _
        // Predicated region
        $region17: #{tpu_custom_call.1} parent=11 // pred_check
          %p222 = pneg %p136
        $region18: #{tpu_custom_call.1} parent=11 // pred_check_branch
          %224 = sbr.rel (%p222) target = $region20
        $region19: #{tpu_custom_call.1} parent=11 // pred_region
          _
        $region20: #{tpu_custom_call.1} parent=11 // pred_fallthru
          _
        // Predicated region
        $region21: #{tpu_custom_call.1} parent=11 // pred_check
          %p225 = pneg %p157
        $region22: #{tpu_custom_call.1} parent=11 // pred_check_branch
          %227 = sbr.rel (%p225) target = $region24
        $region23: #{tpu_custom_call.1} parent=11 // pred_region
          _
        $region24: #{tpu_custom_call.1} parent=11 // pred_fallthru
          _
        // Predicated region
        $region25: #{tpu_custom_call.1} parent=11 // pred_check
          %p228 = pneg %p178
        $region26: #{tpu_custom_call.1} parent=11 // pred_check_branch
          %230 = sbr.rel (%p228) target = $region28
        $region27: #{tpu_custom_call.1} parent=11 // pred_region
          _
        $region28: #{tpu_custom_call.1} parent=11 // pred_fallthru
          _
      $region12: #{tpu_custom_call.1} parent=5 // pred_fallthru
        _
      %p231 = scmp.lt.s32.totalorder %s16, 2
      // Predicated region
      $region29: #{tpu_custom_call.1} parent=5 // pred_check
        %p232 = pneg %p231
      $region30: #{tpu_custom_call.1} parent=5 // pred_check_branch
        %234 = sbr.rel (%p232) target = $region32
      $region31: #{tpu_custom_call.1} parent=5 // pred_region
        // Predicated region
        $region33: #{tpu_custom_call.1} parent=31 // pred_check
          %p235 = pneg %p36
        $region34: #{tpu_custom_call.1} parent=31 // pred_check_branch
          %237 = sbr.rel (%p235) target = $region36
        $region35: #{tpu_custom_call.1} parent=31 // pred_region
          %s238 = smul.u32 16, %s16
          %p239 = scmp.lt.s32.totalorder %s238, 31
          %s240 = scalar_select %p239, %s238, 31
          %s241 = smul.addr %s240, 8
          %s242 = scalar_lea.vmem %s0, %s241
          %s243 = smul.u32 16, %s16
        $region36: #{tpu_custom_call.1} parent=31 // pred_fallthru
          _
        // Predicated region
        $region37: #{tpu_custom_call.1} parent=31 // pred_check
          %p244 = pneg %p62
        $region38: #{tpu_custom_call.1} parent=31 // pred_check_branch
          %246 = sbr.rel (%p244) target = $region40
        $region39: #{tpu_custom_call.1} parent=31 // pred_region
          %s247 = smul.u32 16, %s16
          %p248 = scmp.lt.s32.totalorder %s247, 31
          %s249 = scalar_select %p248, %s247, 31
          %s250 = smul.addr %s249, 4
          %s251 = scalar_lea.vmem %s1, %s250
          %s252 = smul.u32 16, %s16
        $region40: #{tpu_custom_call.1} parent=31 // pred_fallthru
          _
        // Predicated region
        $region41: #{tpu_custom_call.1} parent=31 // pred_check
          %p253 = pneg %p88
        $region42: #{tpu_custom_call.1} parent=31 // pred_check_branch
          %255 = sbr.rel (%p253) target = $region44
        $region43: #{tpu_custom_call.1} parent=31 // pred_region
          %s256 = smul.u32 16, %s16
          %p257 = scmp.lt.s32.totalorder %s256, 31
          %s258 = scalar_select %p257, %s256, 31
          %s259 = smul.addr %s258, 8
          %s260 = scalar_lea.vmem %s2, %s259
          %s261 = smul.u32 16, %s16
        $region44: #{tpu_custom_call.1} parent=31 // pred_fallthru
          _
      $region32: #{tpu_custom_call.1} parent=5 // pred_fallthru
        _
      %p262 = scmp.le.s32.totalorder 1, %s16
      %p263 = scmp.lt.s32.totalorder %s16, 3
      %p264 = pnand %p262, %p263
      %p265 = pneg %p264
      // Predicated region
      $region45: #{tpu_custom_call.1} parent=5 // pred_check
        _
      $region46: #{tpu_custom_call.1} parent=5 // pred_check_branch
        %267 = sbr.rel (%p264) target = $region48
      $region47: #{tpu_custom_call.1} parent=5 // pred_region
        %s268 = ssub.s32 %s16, 1
        %s269 = smul.u32 16, %s21
        %p270 = scmp.lt.s32.totalorder %s269, 31
        %s271 = scalar_select %p270, %s269, 31
        %s272 = smul.addr %s271, 8
        %s273 = scalar_lea.vmem %s0, %s272
        %p274 = pneg %p42
        %p275 = pneg %p39
        %s276 = smul.u32 16, %s21
        %p277 = scmp.lt.s32.totalorder %s276, 31
        %s278 = scalar_select %p277, %s276, 31
        %s279 = smul.addr %s278, 4
        %s280 = scalar_lea.vmem %s1, %s279
        %p281 = pneg %p68
        %p282 = pneg %p65
        %s283 = smul.u32 16, %s21
        %p284 = scmp.lt.s32.totalorder %s283, 31
        %s285 = scalar_select %p284, %s283, 31
        %s286 = smul.addr %s285, 8
        %s287 = scalar_lea.vmem %s2, %s286
        %p288 = pneg %p94
        %p289 = pneg %p91
        %p290 = pneg %p115
        %p291 = pneg %p112
        %p292 = pneg %p136
        %p293 = pneg %p133
        %p294 = pneg %p157
        %p295 = pneg %p154
        %p296 = pneg %p178
        %p297 = pneg %p175
        %p298 = pneg %p204
        %p299 = pneg %p201
        %s300 = sand.u32 %s191, 1
        %s301 = scalar_lea.sflag [#allocation3], %s300
        %s302 = sand.u32 %s191, 1
        %s303 = smul.addr %s302, 128
        %s304 = scalar_lea.vmem [#allocation2], %s303
        %s305 = smul.u32 16, %s21
        %p306 = scmp.lt.s32.totalorder %s305, 31
        %s307 = scalar_select %p306, %s305, 31
        %s308 = smul.addr %s307, 8
        %s309 = scalar_lea.vmem %s0, %s308
        %s310 = smul.u32 16, %s21
        %s311 = smul.u32 16, %s21
        %p312 = scmp.lt.s32.totalorder %s311, 31
        %s313 = scalar_select %p312, %s311, 31
        %s314 = smul.addr %s313, 4
        %s315 = scalar_lea.vmem %s1, %s314
        %s316 = smul.u32 16, %s21
        %s317 = smul.u32 16, %s21
        %p318 = scmp.lt.s32.totalorder %s317, 31
        %s319 = scalar_select %p318, %s317, 31
        %s320 = smul.addr %s319, 8
        %s321 = scalar_lea.vmem %s2, %s320
        %s322 = smul.u32 16, %s21
        %s323 = smul.u32 16, %s21
        %v325 = vld [vmem:[%s309] sm:$0xff]
        %v326 = vld [vmem:[%s309 + $0x8] sm:$0xff]
        %v327 = vld [vmem:[%s309 + $0x10] sm:$0xff]
        %v328 = vld [vmem:[%s309 + $0x18] sm:$0xff]
        %v329 = vld [vmem:[%s309 + $0x20] sm:$0xff]
        %v330 = vld [vmem:[%s309 + $0x28] sm:$0xff]
        %v331 = vld [vmem:[%s309 + $0x30] sm:$0xff]
        %v332 = vld [vmem:[%s309 + $0x38] sm:$0xff]
        %v333 = vld [vmem:[%s309 + $0x40] sm:$0xff]
        %v334 = vld [vmem:[%s309 + $0x48] sm:$0xff]
        %v335 = vld [vmem:[%s309 + $0x50] sm:$0xff]
        %v336 = vld [vmem:[%s309 + $0x58] sm:$0xff]
        %v337 = vld [vmem:[%s309 + $0x60] sm:$0xff]
        %v338 = vld [vmem:[%s309 + $0x68] sm:$0xff]
        %v339 = vld [vmem:[%s309 + $0x70] sm:$0xff]
        %v340 = vld [vmem:[%s309 + $0x78] sm:$0xff]
        %v341 = vld [vmem:[%s315] sm:$0xf]
        %v342 = vld [vmem:[%s315 + $0x4] sm:$0xf]
        %v343 = vld [vmem:[%s315 + $0x8] sm:$0xf]
        %v344 = vld [vmem:[%s315 + $0xc] sm:$0xf]
        %v345 = vld [vmem:[%s315 + $0x10] sm:$0xf]
        %v346 = vld [vmem:[%s315 + $0x14] sm:$0xf]
        %v347 = vld [vmem:[%s315 + $0x18] sm:$0xf]
        %v348 = vld [vmem:[%s315 + $0x1c] sm:$0xf]
        %v349 = vld [vmem:[%s315 + $0x20] sm:$0xf]
        %v350 = vld [vmem:[%s315 + $0x24] sm:$0xf]
        %v351 = vld [vmem:[%s315 + $0x28] sm:$0xf]
        %v352 = vld [vmem:[%s315 + $0x2c] sm:$0xf]
        %v353 = vld [vmem:[%s315 + $0x30] sm:$0xf]
        %v354 = vld [vmem:[%s315 + $0x34] sm:$0xf]
        %v355 = vld [vmem:[%s315 + $0x38] sm:$0xf]
        %v356 = vld [vmem:[%s315 + $0x3c] sm:$0xf]
        %v357 = vunpack.c.l.bf16 %v341
        %v358 = vunpack.c.l.bf16 %v342
        %v359 = vunpack.c.l.bf16 %v343
        %v360 = vunpack.c.l.bf16 %v344
        %v361 = vunpack.c.l.bf16 %v345
        %v362 = vunpack.c.l.bf16 %v346
        %v363 = vunpack.c.l.bf16 %v347
        %v364 = vunpack.c.l.bf16 %v348
        %v365 = vunpack.c.l.bf16 %v349
        %v366 = vunpack.c.l.bf16 %v350
        %v367 = vunpack.c.l.bf16 %v351
        %v368 = vunpack.c.l.bf16 %v352
        %v369 = vunpack.c.l.bf16 %v353
        %v370 = vunpack.c.l.bf16 %v354
        %v371 = vunpack.c.l.bf16 %v355
        %v372 = vunpack.c.l.bf16 %v356
        %v373 = vld [vmem:[%s321] sm:$0xff]
        %v374 = vld [vmem:[%s321 + $0x8] sm:$0xff]
        %v375 = vld [vmem:[%s321 + $0x10] sm:$0xff]
        %v376 = vld [vmem:[%s321 + $0x18] sm:$0xff]
        %v377 = vld [vmem:[%s321 + $0x20] sm:$0xff]
        %v378 = vld [vmem:[%s321 + $0x28] sm:$0xff]
        %v379 = vld [vmem:[%s321 + $0x30] sm:$0xff]
        %v380 = vld [vmem:[%s321 + $0x38] sm:$0xff]
        %v381 = vld [vmem:[%s321 + $0x40] sm:$0xff]
        %v382 = vld [vmem:[%s321 + $0x48] sm:$0xff]
        %v383 = vld [vmem:[%s321 + $0x50] sm:$0xff]
        %v384 = vld [vmem:[%s321 + $0x58] sm:$0xff]
        %v385 = vld [vmem:[%s321 + $0x60] sm:$0xff]
        %v386 = vld [vmem:[%s321 + $0x68] sm:$0xff]
        %v387 = vld [vmem:[%s321 + $0x70] sm:$0xff]
        %v388 = vld [vmem:[%s321 + $0x78] sm:$0xff]
        %v389 = vld [vmem:[%s6] sm:$0x1]
        %v390 = vld [vmem:[%s6 + $0x1] sm:$0x1]
        %v391 = vld [vmem:[%s6 + $0x2] sm:$0x1]
        %v392 = vld [vmem:[%s6 + $0x3] sm:$0x1]
        %v393 = vld [vmem:[%s6 + $0x4] sm:$0x1]
        %v394 = vld [vmem:[%s3] sm:$0xf]
        %vm395 = vcmask 31744
        %v397 = vsel %vm395, %v325, 0
        %v400 = vsel %vm395, %v326, 0
        %v403 = vsel %vm395, %v327, 0
        %v406 = vsel %vm395, %v328, 0
        %v409 = vsel %vm395, %v329, 0
        %v412 = vsel %vm395, %v330, 0
        %v415 = vsel %vm395, %v331, 0
        %v418 = vsel %vm395, %v332, 0
        %v421 = vsel %vm395, %v333, 0
        %v424 = vsel %vm395, %v334, 0
        %v427 = vsel %vm395, %v335, 0
        %v430 = vsel %vm395, %v336, 0
        %v433 = vsel %vm395, %v337, 0
        %v436 = vsel %vm395, %v338, 0
        %v439 = vsel %vm395, %v339, 0
        %v442 = vsel %vm395, %v340, 0
        %vm444 = vcmask 1043456
        %v446 = vsel %vm444, %v394, 0
        %448 = vmatprep.subr.mxu0 0.0
        %449 = vmatpush1.msra.mxu0 %v446
        %450 = vmatprep.subr.mxu0 0.0
        %451 = vmatpush1.msra.mxu0 0.0
        %452 = vmatprep.subr.mxu0 0.0
        %453 = vmatpush1.msra.mxu0 0.0
        %454 = vmatprep.subr.mxu0 0.0
        %455 = vmatpush1.msra.mxu0 0.0
        %456 = vmatprep.subr.mxu0 0.0
        %457 = vmatpush1.msra.mxu0 0.0
        %458 = vmatprep.subr.mxu0 0.0
        %459 = vmatpush1.msra.mxu0 0.0
        %460 = vmatprep.subr.mxu0 0.0
        %461 = vmatpush1.msra.mxu0 0.0
        %462 = vmatprep.subr.mxu0 0.0
        %463 = vmatpush1.msra.mxu0 0.0
        %464 = vmatprep.subr.mxu0 0.0
        %465 = vmatpush1.msra.mxu0 0.0
        %466 = vmatprep.subr.mxu0 0.0
        %467 = vmatpush1.msra.mxu0 0.0
        %468 = vmatprep.subr.mxu0 0.0
        %469 = vmatpush1.msra.mxu0 0.0
        %470 = vmatprep.subr.mxu0 0.0
        %471 = vmatpush1.msra.mxu0 0.0
        %472 = vmatprep.subr.mxu0 0.0
        %473 = vmatpush1.msra.mxu0 0.0
        %474 = vmatprep.subr.mxu0 0.0
        %475 = vmatpush1.msra.mxu0 0.0
        %476 = vmatprep.subr.mxu0 0.0
        %477 = vmatpush1.msra.mxu0 0.0
        %478 = vmatprep.subr.mxu0 0.0
        %479 = vmatpush1.msra.mxu0 0.0
        %480 = vmatprep.subr.mxu0 0.0
        %481 = vmatpush1.msra.mxu0 0.0
        %482 = vmatprep.subr.mxu0 0.0
        %483 = vmatpush1.msra.mxu0 0.0
        %484 = vmatprep.subr.mxu0 0.0
        %485 = vmatpush1.msra.mxu0 0.0
        %486 = vmatprep.subr.mxu0 0.0
        %487 = vmatpush1.msra.mxu0 0.0
        %488 = vmatprep.subr.mxu0 0.0
        %489 = vmatpush1.msra.mxu0 0.0
        %490 = vmatprep.subr.mxu0 0.0
        %491 = vmatpush1.msra.mxu0 0.0
        %492 = vmatprep.subr.mxu0 0.0
        %493 = vmatpush1.msra.mxu0 0.0
        %494 = vmatprep.subr.mxu0 0.0
        %495 = vmatpush1.msra.mxu0 0.0
        %496 = vmatprep.subr.mxu0 0.0
        %497 = vmatpush1.msra.mxu0 0.0
        %498 = vmatprep.subr.mxu0 0.0
        %499 = vmatpush1.msra.mxu0 0.0
        %500 = vmatprep.subr.mxu0 0.0
        %501 = vmatpush1.msra.mxu0 0.0
        %502 = vmatprep.subr.mxu0 0.0
        %503 = vmatpush1.msra.mxu0 0.0
        %504 = vmatprep.subr.mxu0 0.0
        %505 = vmatpush1.msra.mxu0 0.0
        %506 = vmatprep.subr.mxu0 0.0
        %507 = vmatpush1.msra.mxu0 0.0
        %508 = vmatprep.subr.mxu0 0.0
        %509 = vmatpush1.msra.mxu0 0.0
        %510 = vmatprep.subr.mxu0 0.0
        %511 = vmatpush1.msra.mxu0 0.0
        %512 = vmatprep.mubr.f32.mxu0 0.0
        %513 = vmatmul.mubr.f32.gmra.mrb[0].mxu0 %v397
        %v514 = vpop.f32.mrb[0].mxu0
        %v515 = vadd.f32 0.0, %v514
        %v516 = vpop.f32.mrb[0].mxu0
        %517 = vmatprep.mubr.f32.mxu0 0.0
        %518 = vmatmul.mubr.f32.gmra.mrb[0].mxu0 %v400
        %v519 = vpop.f32.mrb[0].mxu0
        %v520 = vadd.f32 0.0, %v519
        %v521 = vpop.f32.mrb[0].mxu0
        %522 = vmatprep.mubr.f32.mxu0 0.0
        %523 = vmatmul.mubr.f32.gmra.mrb[0].mxu0 %v403
        %v524 = vpop.f32.mrb[0].mxu0
        %v525 = vadd.f32 0.0, %v524
        %v526 = vpop.f32.mrb[0].mxu0
        %527 = vmatprep.mubr.f32.mxu0 0.0
        %528 = vmatmul.mubr.f32.gmra.mrb[0].mxu0 %v406
        %v529 = vpop.f32.mrb[0].mxu0
        %v530 = vadd.f32 0.0, %v529
        %v531 = vpop.f32.mrb[0].mxu0
        %532 = vmatprep.mubr.f32.mxu0 0.0
        %533 = vmatmul.mubr.f32.gmra.mrb[0].mxu0 %v409
        %v534 = vpop.f32.mrb[0].mxu0
        %v535 = vadd.f32 0.0, %v534
        %v536 = vpop.f32.mrb[0].mxu0
        %537 = vmatprep.mubr.f32.mxu0 0.0
        %538 = vmatmul.mubr.f32.gmra.mrb[0].mxu0 %v412
        %v539 = vpop.f32.mrb[0].mxu0
        %v540 = vadd.f32 0.0, %v539
        %v541 = vpop.f32.mrb[0].mxu0
        %542 = vmatprep.mubr.f32.mxu0 0.0
        %543 = vmatmul.mubr.f32.gmra.mrb[0].mxu0 %v415
        %v544 = vpop.f32.mrb[0].mxu0
        %v545 = vadd.f32 0.0, %v544
        %v546 = vpop.f32.mrb[0].mxu0
        %547 = vmatprep.mubr.f32.mxu0 0.0
        %548 = vmatmul.mubr.f32.gmra.mrb[0].mxu0 %v418
        %v549 = vpop.f32.mrb[0].mxu0
        %v550 = vadd.f32 0.0, %v549
        %v551 = vpop.f32.mrb[0].mxu0
        %552 = vmatprep.mubr.f32.mxu0 0.0
        %553 = vmatmul.mubr.f32.gmra.mrb[0].mxu0 %v421
        %v554 = vpop.f32.mrb[0].mxu0
        %v555 = vadd.f32 0.0, %v554
        %v556 = vpop.f32.mrb[0].mxu0
        %557 = vmatprep.mubr.f32.mxu0 0.0
        %558 = vmatmul.mubr.f32.gmra.mrb[0].mxu0 %v424
        %v559 = vpop.f32.mrb[0].mxu0
        %v560 = vadd.f32 0.0, %v559
        %v561 = vpop.f32.mrb[0].mxu0
        %562 = vmatprep.mubr.f32.mxu0 0.0
        %563 = vmatmul.mubr.f32.gmra.mrb[0].mxu0 %v427
        %v564 = vpop.f32.mrb[0].mxu0
        %v565 = vadd.f32 0.0, %v564
        %v566 = vpop.f32.mrb[0].mxu0
        %567 = vmatprep.mubr.f32.mxu0 0.0
        %568 = vmatmul.mubr.f32.gmra.mrb[0].mxu0 %v430
        %v569 = vpop.f32.mrb[0].mxu0
        %v570 = vadd.f32 0.0, %v569
        %v571 = vpop.f32.mrb[0].mxu0
        %572 = vmatprep.mubr.f32.mxu0 0.0
        %573 = vmatmul.mubr.f32.gmra.mrb[0].mxu0 %v433
        %v574 = vpop.f32.mrb[0].mxu0
        %v575 = vadd.f32 0.0, %v574
        %v576 = vpop.f32.mrb[0].mxu0
        %577 = vmatprep.mubr.f32.mxu0 0.0
        %578 = vmatmul.mubr.f32.gmra.mrb[0].mxu0 %v436
        %v579 = vpop.f32.mrb[0].mxu0
        %v580 = vadd.f32 0.0, %v579
        %v581 = vpop.f32.mrb[0].mxu0
        %582 = vmatprep.mubr.f32.mxu0 0.0
        %583 = vmatmul.mubr.f32.gmra.mrb[0].mxu0 %v439
        %v584 = vpop.f32.mrb[0].mxu0
        %v585 = vadd.f32 0.0, %v584
        %v586 = vpop.f32.mrb[0].mxu0
        %587 = vmatprep.mubr.f32.mxu0 0.0
        %588 = vmatmul.mubr.f32.gmra.mrb[0].mxu0 %v442
        %v589 = vpop.f32.mrb[0].mxu0
        %v590 = vadd.f32 0.0, %v589
        %v591 = vpop.f32.mrb[0].mxu0
        %592 = vdwg.mxu0
        %593 = vmatprep.subr.mxu0 0.0
        %594 = vmatpush1.xpose.msra.mxu0 %v515
        %595 = vmatprep.subr.mxu0 0.0
        %596 = vmatpush1.xpose.msra.mxu0 %v520
        %597 = vmatprep.subr.mxu0 0.0
        %598 = vmatpush1.xpose.msra.mxu0 %v525
        %599 = vmatprep.subr.mxu0 0.0
        %600 = vmatpush1.xpose.msra.mxu0 %v530
        %601 = vmatprep.subr.mxu0 0.0
        %602 = vmatpush1.xpose.msra.mxu0 %v535
        %603 = vmatprep.subr.mxu0 0.0
        %604 = vmatpush1.xpose.msra.mxu0 %v540
        %605 = vmatprep.subr.mxu0 0.0
        %606 = vmatpush1.xpose.msra.mxu0 %v545
        %607 = vmatprep.subr.mxu0 0.0
        %608 = vmatpush1.xpose.msra.mxu0 %v550
        %609 = vmatprep.subr.mxu0 0.0
        %610 = vmatpush1.xpose.msra.mxu0 %v555
        %611 = vmatprep.subr.mxu0 0.0
        %612 = vmatpush1.xpose.msra.mxu0 %v560
        %613 = vmatprep.subr.mxu0 0.0
        %614 = vmatpush1.xpose.msra.mxu0 %v565
        %615 = vmatprep.subr.mxu0 0.0
        %616 = vmatpush1.xpose.msra.mxu0 %v570
        %617 = vmatprep.subr.mxu0 0.0
        %618 = vmatpush1.xpose.msra.mxu0 %v575
        %619 = vmatprep.subr.mxu0 0.0
        %620 = vmatpush1.xpose.msra.mxu0 %v580
        %621 = vmatprep.subr.mxu0 0.0
        %622 = vmatpush1.xpose.msra.mxu0 %v585
        %623 = vmatprep.subr.mxu0 0.0
        %624 = vmatpush1.xpose.msra.mxu0 %v590
        %625 = vmatprep.subr.mxu0 0.0
        %626 = vmatpush1.xpose.msra.mxu0 0.0
        %627 = vmatprep.subr.mxu0 0.0
        %628 = vmatpush1.xpose.msra.mxu0 0.0
        %629 = vmatprep.subr.mxu0 0.0
        %630 = vmatpush1.xpose.msra.mxu0 0.0
        %631 = vmatprep.subr.mxu0 0.0
        %632 = vmatpush1.xpose.msra.mxu0 0.0
        %633 = vmatprep.subr.mxu0 0.0
        %634 = vmatpush1.xpose.msra.mxu0 0.0
        %635 = vmatprep.subr.mxu0 0.0
        %636 = vmatpush1.xpose.msra.mxu0 0.0
        %637 = vmatprep.subr.mxu0 0.0
        %638 = vmatpush1.xpose.msra.mxu0 0.0
        %639 = vmatprep.subr.mxu0 0.0
        %640 = vmatpush1.xpose.msra.mxu0 0.0
        %641 = vmatprep.subr.mxu0 0.0
        %642 = vmatpush1.xpose.msra.mxu0 0.0
        %643 = vmatprep.subr.mxu0 0.0
        %644 = vmatpush1.xpose.msra.mxu0 0.0
        %645 = vmatprep.subr.mxu0 0.0
        %646 = vmatpush1.xpose.msra.mxu0 0.0
        %647 = vmatprep.subr.mxu0 0.0
        %648 = vmatpush1.xpose.msra.mxu0 0.0
        %649 = vmatprep.subr.mxu0 0.0
        %650 = vmatpush1.xpose.msra.mxu0 0.0
        %651 = vmatprep.subr.mxu0 0.0
        %652 = vmatpush1.xpose.msra.mxu0 0.0
        %653 = vmatprep.subr.mxu0 0.0
        %654 = vmatpush1.xpose.msra.mxu0 0.0
        %655 = vmatprep.subr.mxu0 0.0
        %656 = vmatpush1.xpose.msra.mxu0 0.0
        %657 = vmatprep.mubr.f32.mxu0 0.0
        %658 = vmatmul.mubr.f32.gmra.mrb[0].mxu0 %v389
        %v659 = vpop.f32.mrb[0].mxu0
        %v660 = vadd.f32 0.0, %v659
        %v661 = vpop.f32.mrb[0].mxu0
        %662 = vdwg.mxu0
        %664 = vset.pattern.permute.xlu0 127
        %665 = vperm.xlu0 %664, %v515
        %v666 = vpop.permute.xlu0 %665
        %669 = vset.pattern.permute.xlu0 127
        %670 = vperm.xlu0 %669, %v520
        %v671 = vpop.permute.xlu0 %670
        %674 = vset.pattern.permute.xlu0 127
        %675 = vperm.xlu0 %674, %v525
        %v676 = vpop.permute.xlu0 %675
        %679 = vset.pattern.permute.xlu0 127
        %680 = vperm.xlu0 %679, %v530
        %v681 = vpop.permute.xlu0 %680
        %684 = vset.pattern.permute.xlu0 127
        %685 = vperm.xlu0 %684, %v535
        %v686 = vpop.permute.xlu0 %685
        %689 = vset.pattern.permute.xlu0 127
        %690 = vperm.xlu0 %689, %v540
        %v691 = vpop.permute.xlu0 %690
        %694 = vset.pattern.permute.xlu0 127
        %695 = vperm.xlu0 %694, %v545
        %v696 = vpop.permute.xlu0 %695
        %699 = vset.pattern.permute.xlu0 127
        %700 = vperm.xlu0 %699, %v550
        %v701 = vpop.permute.xlu0 %700
        %704 = vset.pattern.permute.xlu0 127
        %705 = vperm.xlu0 %704, %v555
        %v706 = vpop.permute.xlu0 %705
        %709 = vset.pattern.permute.xlu0 127
        %710 = vperm.xlu0 %709, %v560
        %v711 = vpop.permute.xlu0 %710
        %714 = vset.pattern.permute.xlu0 127
        %715 = vperm.xlu0 %714, %v565
        %v716 = vpop.permute.xlu0 %715
        %719 = vset.pattern.permute.xlu0 127
        %720 = vperm.xlu0 %719, %v570
        %v721 = vpop.permute.xlu0 %720
        %724 = vset.pattern.permute.xlu0 127
        %725 = vperm.xlu0 %724, %v575
        %v726 = vpop.permute.xlu0 %725
        %729 = vset.pattern.permute.xlu0 127
        %730 = vperm.xlu0 %729, %v580
        %v731 = vpop.permute.xlu0 %730
        %734 = vset.pattern.permute.xlu0 127
        %735 = vperm.xlu0 %734, %v585
        %v736 = vpop.permute.xlu0 %735
        %739 = vset.pattern.permute.xlu0 127
        %740 = vperm.xlu0 %739, %v590
        %v741 = vpop.permute.xlu0 %740
        %v743 = vlaneseq
        %v744 = vshrl.u32 %v743, 7
        %v745 = vsub.s32 0, %v744
        %v746 = vrot.slane %v660, %v745
        %v747 = vadd.f32 %v666, %v746
        %v748 = vadd.f32 %v671, %v746
        %v749 = vadd.f32 %v676, %v746
        %v750 = vadd.f32 %v681, %v746
        %v751 = vadd.f32 %v686, %v746
        %v752 = vadd.f32 %v691, %v746
        %v753 = vadd.f32 %v696, %v746
        %v754 = vadd.f32 %v701, %v746
        %v755 = vadd.f32 %v706, %v746
        %v756 = vadd.f32 %v711, %v746
        %v757 = vadd.f32 %v716, %v746
        %v758 = vadd.f32 %v721, %v746
        %v759 = vadd.f32 %v726, %v746
        %v760 = vadd.f32 %v731, %v746
        %v761 = vadd.f32 %v736, %v746
        %v762 = vadd.f32 %v741, %v746
        %v763 = vmul.f32 %v747, 0.2
        %v764 = vmul.f32 %v748, 0.2
        %v765 = vmul.f32 %v749, 0.2
        %v766 = vmul.f32 %v750, 0.2
        %v767 = vmul.f32 %v751, 0.2
        %v768 = vmul.f32 %v752, 0.2
        %v769 = vmul.f32 %v753, 0.2
        %v770 = vmul.f32 %v754, 0.2
        %v771 = vmul.f32 %v755, 0.2
        %v772 = vmul.f32 %v756, 0.2
        %v773 = vmul.f32 %v757, 0.2
        %v774 = vmul.f32 %v758, 0.2
        %v775 = vmul.f32 %v759, 0.2
        %v776 = vmul.f32 %v760, 0.2
        %v777 = vmul.f32 %v761, 0.2
        %v778 = vmul.f32 %v762, 0.2
        %v779 = vmax.f32 %v747, %v763
        %v780 = vmax.f32 %v748, %v764
        %v781 = vmax.f32 %v749, %v765
        %v782 = vmax.f32 %v750, %v766
        %v783 = vmax.f32 %v751, %v767
        %v784 = vmax.f32 %v752, %v768
        %v785 = vmax.f32 %v753, %v769
        %v786 = vmax.f32 %v754, %v770
        %v787 = vmax.f32 %v755, %v771
        %v788 = vmax.f32 %v756, %v772
        %v789 = vmax.f32 %v757, %v773
        %v790 = vmax.f32 %v758, %v774
        %v791 = vmax.f32 %v759, %v775
        %v792 = vmax.f32 %v760, %v776
        %v793 = vmax.f32 %v761, %v777
        %v794 = vmax.f32 %v762, %v778
        %v795 = vadd.f32 %v779, %v357
        %v796 = vadd.f32 %v780, %v358
        %v797 = vadd.f32 %v781, %v359
        %v798 = vadd.f32 %v782, %v360
        %v799 = vadd.f32 %v783, %v361
        %v800 = vadd.f32 %v784, %v362
        %v801 = vadd.f32 %v785, %v363
        %v802 = vadd.f32 %v786, %v364
        %v803 = vadd.f32 %v787, %v365
        %v804 = vadd.f32 %v788, %v366
        %v805 = vadd.f32 %v789, %v367
        %v806 = vadd.f32 %v790, %v368
        %v807 = vadd.f32 %v791, %v369
        %v808 = vadd.f32 %v792, %v370
        %v809 = vadd.f32 %v793, %v371
        %v810 = vadd.f32 %v794, %v372
        %811 = vmax.xlane.f32.xlu0 %v795
        %v812 = vpop.xlane.xlu0 %811
        %813 = vmax.xlane.f32.xlu0 %v796
        %v814 = vpop.xlane.xlu0 %813
        %815 = vmax.xlane.f32.xlu0 %v797
        %v816 = vpop.xlane.xlu0 %815
        %817 = vmax.xlane.f32.xlu0 %v798
        %v818 = vpop.xlane.xlu0 %817
        %819 = vmax.xlane.f32.xlu0 %v799
        %v820 = vpop.xlane.xlu0 %819
        %821 = vmax.xlane.f32.xlu0 %v800
        %v822 = vpop.xlane.xlu0 %821
        %823 = vmax.xlane.f32.xlu0 %v801
        %v824 = vpop.xlane.xlu0 %823
        %825 = vmax.xlane.f32.xlu0 %v802
        %v826 = vpop.xlane.xlu0 %825
        %827 = vmax.xlane.f32.xlu0 %v803
        %v828 = vpop.xlane.xlu0 %827
        %829 = vmax.xlane.f32.xlu0 %v804
        %v830 = vpop.xlane.xlu0 %829
        %831 = vmax.xlane.f32.xlu0 %v805
        %v832 = vpop.xlane.xlu0 %831
        %833 = vmax.xlane.f32.xlu0 %v806
        %v834 = vpop.xlane.xlu0 %833
        %835 = vmax.xlane.f32.xlu0 %v807
        %v836 = vpop.xlane.xlu0 %835
        %837 = vmax.xlane.f32.xlu0 %v808
        %v838 = vpop.xlane.xlu0 %837
        %839 = vmax.xlane.f32.xlu0 %v809
        %v840 = vpop.xlane.xlu0 %839
        %841 = vmax.xlane.f32.xlu0 %v810
        %v842 = vpop.xlane.xlu0 %841
        %v843 = vsub.f32 %v795, %v812
        %v844 = vsub.f32 %v796, %v814
        %v845 = vsub.f32 %v797, %v816
        %v846 = vsub.f32 %v798, %v818
        %v847 = vsub.f32 %v799, %v820
        %v848 = vsub.f32 %v800, %v822
        %v849 = vsub.f32 %v801, %v824
        %v850 = vsub.f32 %v802, %v826
        %v851 = vsub.f32 %v803, %v828
        %v852 = vsub.f32 %v804, %v830
        %v853 = vsub.f32 %v805, %v832
        %v854 = vsub.f32 %v806, %v834
        %v855 = vsub.f32 %v807, %v836
        %v856 = vsub.f32 %v808, %v838
        %v857 = vsub.f32 %v809, %v840
        %v858 = vsub.f32 %v810, %v842
        %v859 = vmul.f32 %v843, 1.442695
        %v860 = vpow.pop %v859
        %v861 = vmul.f32 %v844, 1.442695
        %v862 = vpow.pop %v861
        %v863 = vmul.f32 %v845, 1.442695
        %v864 = vpow.pop %v863
        %v865 = vmul.f32 %v846, 1.442695
        %v866 = vpow.pop %v865
        %v867 = vmul.f32 %v847, 1.442695
        %v868 = vpow.pop %v867
        %v869 = vmul.f32 %v848, 1.442695
        %v870 = vpow.pop %v869
        %v871 = vmul.f32 %v849, 1.442695
        %v872 = vpow.pop %v871
        %v873 = vmul.f32 %v850, 1.442695
        %v874 = vpow.pop %v873
        %v875 = vmul.f32 %v851, 1.442695
        %v876 = vpow.pop %v875
        %v877 = vmul.f32 %v852, 1.442695
        %v878 = vpow.pop %v877
        %v879 = vmul.f32 %v853, 1.442695
        %v880 = vpow.pop %v879
        %v881 = vmul.f32 %v854, 1.442695
        %v882 = vpow.pop %v881
        %v883 = vmul.f32 %v855, 1.442695
        %v884 = vpow.pop %v883
        %v885 = vmul.f32 %v856, 1.442695
        %v886 = vpow.pop %v885
        %v887 = vmul.f32 %v857, 1.442695
        %v888 = vpow.pop %v887
        %v889 = vmul.f32 %v858, 1.442695
        %v890 = vpow.pop %v889
        %891 = vadd.xlane.f32.xlu0 %v860
        %v892 = vpop.xlane.xlu0 %891
        %893 = vadd.xlane.f32.xlu0 %v862
        %v894 = vpop.xlane.xlu0 %893
        %895 = vadd.xlane.f32.xlu0 %v864
        %v896 = vpop.xlane.xlu0 %895
        %897 = vadd.xlane.f32.xlu0 %v866
        %v898 = vpop.xlane.xlu0 %897
        %899 = vadd.xlane.f32.xlu0 %v868
        %v900 = vpop.xlane.xlu0 %899
        %901 = vadd.xlane.f32.xlu0 %v870
        %v902 = vpop.xlane.xlu0 %901
        %903 = vadd.xlane.f32.xlu0 %v872
        %v904 = vpop.xlane.xlu0 %903
        %905 = vadd.xlane.f32.xlu0 %v874
        %v906 = vpop.xlane.xlu0 %905
        %907 = vadd.xlane.f32.xlu0 %v876
        %v908 = vpop.xlane.xlu0 %907
        %909 = vadd.xlane.f32.xlu0 %v878
        %v910 = vpop.xlane.xlu0 %909
        %911 = vadd.xlane.f32.xlu0 %v880
        %v912 = vpop.xlane.xlu0 %911
        %913 = vadd.xlane.f32.xlu0 %v882
        %v914 = vpop.xlane.xlu0 %913
        %915 = vadd.xlane.f32.xlu0 %v884
        %v916 = vpop.xlane.xlu0 %915
        %917 = vadd.xlane.f32.xlu0 %v886
        %v918 = vpop.xlane.xlu0 %917
        %919 = vadd.xlane.f32.xlu0 %v888
        %v920 = vpop.xlane.xlu0 %919
        %921 = vadd.xlane.f32.xlu0 %v890
        %v922 = vpop.xlane.xlu0 %921
        %v923 = vrcp.pop %v892
        %v924 = vmul.f32 %v373, %v923
        %v925 = vrcp.pop %v894
        %v926 = vmul.f32 %v374, %v925
        %v927 = vrcp.pop %v896
        %v928 = vmul.f32 %v375, %v927
        %v929 = vrcp.pop %v898
        %v930 = vmul.f32 %v376, %v929
        %v931 = vrcp.pop %v900
        %v932 = vmul.f32 %v377, %v931
        %v933 = vrcp.pop %v902
        %v934 = vmul.f32 %v378, %v933
        %v935 = vrcp.pop %v904
        %v936 = vmul.f32 %v379, %v935
        %v937 = vrcp.pop %v906
        %v938 = vmul.f32 %v380, %v937
        %v939 = vrcp.pop %v908
        %v940 = vmul.f32 %v381, %v939
        %v941 = vrcp.pop %v910
        %v942 = vmul.f32 %v382, %v941
        %v943 = vrcp.pop %v912
        %v944 = vmul.f32 %v383, %v943
        %v945 = vrcp.pop %v914
        %v946 = vmul.f32 %v384, %v945
        %v947 = vrcp.pop %v916
        %v948 = vmul.f32 %v385, %v947
        %v949 = vrcp.pop %v918
        %v950 = vmul.f32 %v386, %v949
        %v951 = vrcp.pop %v920
        %v952 = vmul.f32 %v387, %v951
        %v953 = vrcp.pop %v922
        %v954 = vmul.f32 %v388, %v953
        %v955 = vpack.c.bf16 %v862, %v860
        %v956 = vpack.c.bf16 %v866, %v864
        %v957 = vpack.c.bf16 %v870, %v868
        %v958 = vpack.c.bf16 %v874, %v872
        %v959 = vpack.c.bf16 %v878, %v876
        %v960 = vpack.c.bf16 %v882, %v880
        %v961 = vpack.c.bf16 %v886, %v884
        %v962 = vpack.c.bf16 %v890, %v888
        %v963 = vpack.c.bf16 %v520, %v515
        %v964 = vpack.c.bf16 %v530, %v525
        %v965 = vpack.c.bf16 %v540, %v535
        %v966 = vpack.c.bf16 %v550, %v545
        %v967 = vpack.c.bf16 %v560, %v555
        %v968 = vpack.c.bf16 %v570, %v565
        %v969 = vpack.c.bf16 %v580, %v575
        %v970 = vpack.c.bf16 %v590, %v585
        %971 = vmatprep.subr.bf16.mxu0 0
        %972 = vmatpush1.bf16.msra.mxu0 %v963
        %973 = vmatprep.subr.bf16.mxu0 0
        %974 = vmatpush1.bf16.msra.mxu0 %v964
        %975 = vmatprep.subr.bf16.mxu0 0
        %976 = vmatpush1.bf16.msra.mxu0 %v965
        %977 = vmatprep.subr.bf16.mxu0 0
        %978 = vmatpush1.bf16.msra.mxu0 %v966
        %979 = vmatprep.subr.bf16.mxu0 0
        %980 = vmatpush1.bf16.msra.mxu0 %v967
        %981 = vmatprep.subr.bf16.mxu0 0
        %982 = vmatpush1.bf16.msra.mxu0 %v968
        %983 = vmatprep.subr.bf16.mxu0 0
        %984 = vmatpush1.bf16.msra.mxu0 %v969
        %985 = vmatprep.subr.bf16.mxu0 0
        %986 = vmatpush1.bf16.msra.mxu0 %v970
        %987 = vmatprep.subr.bf16.mxu0 0
        %988 = vmatpush1.bf16.msra.mxu0 0
        %989 = vmatprep.subr.bf16.mxu0 0
        %990 = vmatpush1.bf16.msra.mxu0 0
        %991 = vmatprep.subr.bf16.mxu0 0
        %992 = vmatpush1.bf16.msra.mxu0 0
        %993 = vmatprep.subr.bf16.mxu0 0
        %994 = vmatpush1.bf16.msra.mxu0 0
        %995 = vmatprep.subr.bf16.mxu0 0
        %996 = vmatpush1.bf16.msra.mxu0 0
        %997 = vmatprep.subr.bf16.mxu0 0
        %998 = vmatpush1.bf16.msra.mxu0 0
        %999 = vmatprep.subr.bf16.mxu0 0
        %1000 = vmatpush1.bf16.msra.mxu0 0
        %1001 = vmatprep.subr.bf16.mxu0 0
        %1002 = vmatpush1.bf16.msra.mxu0 0
        %1003 = vmatprep.mubr.bf16.mxu0 0
        %1004 = vmatmul.mubr.bf16.gmra.mrb[0].mxu0 %v955
        %v1005 = vpop.f32.mrb[0].mxu0
        %v1006 = vadd.f32 0.0, %v1005
        %v1007 = vpop.f32.mrb[0].mxu0
        %v1008 = vpop.f32.mrb[0].mxu0
        %v1009 = vadd.f32 0.0, %v1008
        %v1010 = vpop.f32.mrb[0].mxu0
        %1011 = vmatprep.mubr.bf16.mxu0 0
        %1012 = vmatmul.mubr.bf16.gmra.mrb[0].mxu0 %v956
        %v1013 = vpop.f32.mrb[0].mxu0
        %v1014 = vadd.f32 0.0, %v1013
        %v1015 = vpop.f32.mrb[0].mxu0
        %v1016 = vpop.f32.mrb[0].mxu0
        %v1017 = vadd.f32 0.0, %v1016
        %v1018 = vpop.f32.mrb[0].mxu0
        %1019 = vmatprep.mubr.bf16.mxu0 0
        %1020 = vmatmul.mubr.bf16.gmra.mrb[0].mxu0 %v957
        %v1021 = vpop.f32.mrb[0].mxu0
        %v1022 = vadd.f32 0.0, %v1021
        %v1023 = vpop.f32.mrb[0].mxu0
        %v1024 = vpop.f32.mrb[0].mxu0
        %v1025 = vadd.f32 0.0, %v1024
        %v1026 = vpop.f32.mrb[0].mxu0
        %1027 = vmatprep.mubr.bf16.mxu0 0
        %1028 = vmatmul.mubr.bf16.gmra.mrb[0].mxu0 %v958
        %v1029 = vpop.f32.mrb[0].mxu0
        %v1030 = vadd.f32 0.0, %v1029
        %v1031 = vpop.f32.mrb[0].mxu0
        %v1032 = vpop.f32.mrb[0].mxu0
        %v1033 = vadd.f32 0.0, %v1032
        %v1034 = vpop.f32.mrb[0].mxu0
        %1035 = vmatprep.mubr.bf16.mxu0 0
        %1036 = vmatmul.mubr.bf16.gmra.mrb[0].mxu0 %v959
        %v1037 = vpop.f32.mrb[0].mxu0
        %v1038 = vadd.f32 0.0, %v1037
        %v1039 = vpop.f32.mrb[0].mxu0
        %v1040 = vpop.f32.mrb[0].mxu0
        %v1041 = vadd.f32 0.0, %v1040
        %v1042 = vpop.f32.mrb[0].mxu0
        %1043 = vmatprep.mubr.bf16.mxu0 0
        %1044 = vmatmul.mubr.bf16.gmra.mrb[0].mxu0 %v960
        %v1045 = vpop.f32.mrb[0].mxu0
        %v1046 = vadd.f32 0.0, %v1045
        %v1047 = vpop.f32.mrb[0].mxu0
        %v1048 = vpop.f32.mrb[0].mxu0
        %v1049 = vadd.f32 0.0, %v1048
        %v1050 = vpop.f32.mrb[0].mxu0
        %1051 = vmatprep.mubr.bf16.mxu0 0
        %1052 = vmatmul.mubr.bf16.gmra.mrb[0].mxu0 %v961
        %v1053 = vpop.f32.mrb[0].mxu0
        %v1054 = vadd.f32 0.0, %v1053
        %v1055 = vpop.f32.mrb[0].mxu0
        %v1056 = vpop.f32.mrb[0].mxu0
        %v1057 = vadd.f32 0.0, %v1056
        %v1058 = vpop.f32.mrb[0].mxu0
        %1059 = vmatprep.mubr.bf16.mxu0 0
        %1060 = vmatmul.mubr.bf16.gmra.mrb[0].mxu0 %v962
        %v1061 = vpop.f32.mrb[0].mxu0
        %v1062 = vadd.f32 0.0, %v1061
        %v1063 = vpop.f32.mrb[0].mxu0
        %v1064 = vpop.f32.mrb[0].mxu0
        %v1065 = vadd.f32 0.0, %v1064
        %v1066 = vpop.f32.mrb[0].mxu0
        %1067 = vdwg.mxu0
        %1069 = vset.pattern.permute.xlu0 0
        %1070 = vperm.xlu0 %1069, %v924
        %v1071 = vpop.permute.xlu0 %1070
        %1074 = vset.pattern.permute.xlu0 0
        %1075 = vperm.xlu0 %1074, %v926
        %v1076 = vpop.permute.xlu0 %1075
        %1079 = vset.pattern.permute.xlu0 0
        %1080 = vperm.xlu0 %1079, %v928
        %v1081 = vpop.permute.xlu0 %1080
        %1084 = vset.pattern.permute.xlu0 0
        %1085 = vperm.xlu0 %1084, %v930
        %v1086 = vpop.permute.xlu0 %1085
        %1089 = vset.pattern.permute.xlu0 0
        %1090 = vperm.xlu0 %1089, %v932
        %v1091 = vpop.permute.xlu0 %1090
        %1094 = vset.pattern.permute.xlu0 0
        %1095 = vperm.xlu0 %1094, %v934
        %v1096 = vpop.permute.xlu0 %1095
        %1099 = vset.pattern.permute.xlu0 0
        %1100 = vperm.xlu0 %1099, %v936
        %v1101 = vpop.permute.xlu0 %1100
        %1104 = vset.pattern.permute.xlu0 0
        %1105 = vperm.xlu0 %1104, %v938
        %v1106 = vpop.permute.xlu0 %1105
        %1109 = vset.pattern.permute.xlu0 0
        %1110 = vperm.xlu0 %1109, %v940
        %v1111 = vpop.permute.xlu0 %1110
        %1114 = vset.pattern.permute.xlu0 0
        %1115 = vperm.xlu0 %1114, %v942
        %v1116 = vpop.permute.xlu0 %1115
        %1119 = vset.pattern.permute.xlu0 0
        %1120 = vperm.xlu0 %1119, %v944
        %v1121 = vpop.permute.xlu0 %1120
        %1124 = vset.pattern.permute.xlu0 0
        %1125 = vperm.xlu0 %1124, %v946
        %v1126 = vpop.permute.xlu0 %1125
        %1129 = vset.pattern.permute.xlu0 0
        %1130 = vperm.xlu0 %1129, %v948
        %v1131 = vpop.permute.xlu0 %1130
        %1134 = vset.pattern.permute.xlu0 0
        %1135 = vperm.xlu0 %1134, %v950
        %v1136 = vpop.permute.xlu0 %1135
        %1139 = vset.pattern.permute.xlu0 0
        %1140 = vperm.xlu0 %1139, %v952
        %v1141 = vpop.permute.xlu0 %1140
        %1144 = vset.pattern.permute.xlu0 0
        %1145 = vperm.xlu0 %1144, %v954
        %v1146 = vpop.permute.xlu0 %1145
        %v1148 = vmul.f32 %v1006, %v1071
        %v1149 = vmul.f32 %v1009, %v1076
        %v1150 = vmul.f32 %v1014, %v1081
        %v1151 = vmul.f32 %v1017, %v1086
        %v1152 = vmul.f32 %v1022, %v1091
        %v1153 = vmul.f32 %v1025, %v1096
        %v1154 = vmul.f32 %v1030, %v1101
        %v1155 = vmul.f32 %v1033, %v1106
        %v1156 = vmul.f32 %v1038, %v1111
        %v1157 = vmul.f32 %v1041, %v1116
        %v1158 = vmul.f32 %v1046, %v1121
        %v1159 = vmul.f32 %v1049, %v1126
        %v1160 = vmul.f32 %v1054, %v1131
        %v1161 = vmul.f32 %v1057, %v1136
        %v1162 = vmul.f32 %v1062, %v1141
        %v1163 = vmul.f32 %v1065, %v1146
        %v1164 = vlaneseq
        %v1165 = vshrl.u32 %v1164, 7
        %v1166 = vsub.s32 0, %v1165
        %v1167 = vrot.slane %v390, %v1166
        %v1168 = vadd.f32 %v1148, %v1167
        %v1169 = vadd.f32 %v1149, %v1167
        %v1170 = vadd.f32 %v1150, %v1167
        %v1171 = vadd.f32 %v1151, %v1167
        %v1172 = vadd.f32 %v1152, %v1167
        %v1173 = vadd.f32 %v1153, %v1167
        %v1174 = vadd.f32 %v1154, %v1167
        %v1175 = vadd.f32 %v1155, %v1167
        %v1176 = vadd.f32 %v1156, %v1167
        %v1177 = vadd.f32 %v1157, %v1167
        %v1178 = vadd.f32 %v1158, %v1167
        %v1179 = vadd.f32 %v1159, %v1167
        %v1180 = vadd.f32 %v1160, %v1167
        %v1181 = vadd.f32 %v1161, %v1167
        %v1182 = vadd.f32 %v1162, %v1167
        %v1183 = vadd.f32 %v1163, %v1167
        %v1184 = vmax.f32 %v1168, 0.0
        %v1185 = vmax.f32 %v1169, 0.0
        %v1186 = vmax.f32 %v1170, 0.0
        %v1187 = vmax.f32 %v1171, 0.0
        %v1188 = vmax.f32 %v1172, 0.0
        %v1189 = vmax.f32 %v1173, 0.0
        %v1190 = vmax.f32 %v1174, 0.0
        %v1191 = vmax.f32 %v1175, 0.0
        %v1192 = vmax.f32 %v1176, 0.0
        %v1193 = vmax.f32 %v1177, 0.0
        %v1194 = vmax.f32 %v1178, 0.0
        %v1195 = vmax.f32 %v1179, 0.0
        %v1196 = vmax.f32 %v1180, 0.0
        %v1197 = vmax.f32 %v1181, 0.0
        %v1198 = vmax.f32 %v1182, 0.0
        %v1199 = vmax.f32 %v1183, 0.0
        %v1200 = vld [vmem:[%s4] sm:$0xff]
        %v1201 = vld [vmem:[%s4 + $0x8] sm:$0xff]
        %v1202 = vld [vmem:[%s4 + $0x10] sm:$0xff]
        %v1203 = vld [vmem:[%s4 + $0x18] sm:$0xff]
        %v1204 = vld [vmem:[%s4 + $0x20] sm:$0xff]
        %v1205 = vld [vmem:[%s4 + $0x28] sm:$0xff]
        %v1206 = vld [vmem:[%s4 + $0x30] sm:$0xff]
        %v1207 = vld [vmem:[%s4 + $0x38] sm:$0xff]
        %v1208 = vld [vmem:[%s4 + $0x40] sm:$0xff]
        %v1209 = vld [vmem:[%s4 + $0x48] sm:$0xff]
        %v1210 = vld [vmem:[%s4 + $0x50] sm:$0xff]
        %v1211 = vld [vmem:[%s4 + $0x58] sm:$0xff]
        %v1212 = vld [vmem:[%s4 + $0x60] sm:$0xff]
        %v1213 = vld [vmem:[%s4 + $0x68] sm:$0xff]
        %v1214 = vld [vmem:[%s4 + $0x70] sm:$0xff]
        %v1215 = vld [vmem:[%s4 + $0x78] sm:$0xff]
        %1216 = vmatprep.subr.mxu0 0.0
        %1217 = vmatpush1.msra.mxu0 %v1200
        %1218 = vmatprep.subr.mxu0 0.0
        %1219 = vmatpush1.msra.mxu0 %v1201
        %1220 = vmatprep.subr.mxu0 0.0
        %1221 = vmatpush1.msra.mxu0 %v1202
        %1222 = vmatprep.subr.mxu0 0.0
        %1223 = vmatpush1.msra.mxu0 %v1203
        %1224 = vmatprep.subr.mxu0 0.0
        %1225 = vmatpush1.msra.mxu0 %v1204
        %1226 = vmatprep.subr.mxu0 0.0
        %1227 = vmatpush1.msra.mxu0 %v1205
        %1228 = vmatprep.subr.mxu0 0.0
        %1229 = vmatpush1.msra.mxu0 %v1206
        %1230 = vmatprep.subr.mxu0 0.0
        %1231 = vmatpush1.msra.mxu0 %v1207
        %1232 = vmatprep.subr.mxu0 0.0
        %1233 = vmatpush1.msra.mxu0 %v1208
        %1234 = vmatprep.subr.mxu0 0.0
        %1235 = vmatpush1.msra.mxu0 %v1209
        %1236 = vmatprep.subr.mxu0 0.0
        %1237 = vmatpush1.msra.mxu0 %v1210
        %1238 = vmatprep.subr.mxu0 0.0
        %1239 = vmatpush1.msra.mxu0 %v1211
        %1240 = vmatprep.subr.mxu0 0.0
        %1241 = vmatpush1.msra.mxu0 %v1212
        %1242 = vmatprep.subr.mxu0 0.0
        %1243 = vmatpush1.msra.mxu0 %v1213
        %1244 = vmatprep.subr.mxu0 0.0
        %1245 = vmatpush1.msra.mxu0 %v1214
        %1246 = vmatprep.subr.mxu0 0.0
        %1247 = vmatpush1.msra.mxu0 %v1215
        %1248 = vmatprep.subr.mxu0 0.0
        %1249 = vmatpush1.msra.mxu0 0.0
        %1250 = vmatprep.subr.mxu0 0.0
        %1251 = vmatpush1.msra.mxu0 0.0
        %1252 = vmatprep.subr.mxu0 0.0
        %1253 = vmatpush1.msra.mxu0 0.0
        %1254 = vmatprep.subr.mxu0 0.0
        %1255 = vmatpush1.msra.mxu0 0.0
        %1256 = vmatprep.subr.mxu0 0.0
        %1257 = vmatpush1.msra.mxu0 0.0
        %1258 = vmatprep.subr.mxu0 0.0
        %1259 = vmatpush1.msra.mxu0 0.0
        %1260 = vmatprep.subr.mxu0 0.0
        %1261 = vmatpush1.msra.mxu0 0.0
        %1262 = vmatprep.subr.mxu0 0.0
        %1263 = vmatpush1.msra.mxu0 0.0
        %1264 = vmatprep.subr.mxu0 0.0
        %1265 = vmatpush1.msra.mxu0 0.0
        %1266 = vmatprep.subr.mxu0 0.0
        %1267 = vmatpush1.msra.mxu0 0.0
        %1268 = vmatprep.subr.mxu0 0.0
        %1269 = vmatpush1.msra.mxu0 0.0
        %1270 = vmatprep.subr.mxu0 0.0
        %1271 = vmatpush1.msra.mxu0 0.0
        %1272 = vmatprep.subr.mxu0 0.0
        %1273 = vmatpush1.msra.mxu0 0.0
        %1274 = vmatprep.subr.mxu0 0.0
        %1275 = vmatpush1.msra.mxu0 0.0
        %1276 = vmatprep.subr.mxu0 0.0
        %1277 = vmatpush1.msra.mxu0 0.0
        %1278 = vmatprep.subr.mxu0 0.0
        %1279 = vmatpush1.msra.mxu0 0.0
        %1280 = vmatprep.mubr.f32.mxu0 0.0
        %1281 = vmatmul.mubr.f32.gmra.mrb[0].mxu0 %v1184
        %v1282 = vpop.f32.mrb[0].mxu0
        %v1283 = vadd.f32 0.0, %v1282
        %v1284 = vpop.f32.mrb[0].mxu0
        %1285 = vmatprep.mubr.f32.mxu0 0.0
        %1286 = vmatmul.mubr.f32.gmra.mrb[0].mxu0 %v1185
        %v1287 = vpop.f32.mrb[0].mxu0
        %v1288 = vadd.f32 0.0, %v1287
        %v1289 = vpop.f32.mrb[0].mxu0
        %1290 = vmatprep.mubr.f32.mxu0 0.0
        %1291 = vmatmul.mubr.f32.gmra.mrb[0].mxu0 %v1186
        %v1292 = vpop.f32.mrb[0].mxu0
        %v1293 = vadd.f32 0.0, %v1292
        %v1294 = vpop.f32.mrb[0].mxu0
        %1295 = vmatprep.mubr.f32.mxu0 0.0
        %1296 = vmatmul.mubr.f32.gmra.mrb[0].mxu0 %v1187
        %v1297 = vpop.f32.mrb[0].mxu0
        %v1298 = vadd.f32 0.0, %v1297
        %v1299 = vpop.f32.mrb[0].mxu0
        %1300 = vmatprep.mubr.f32.mxu0 0.0
        %1301 = vmatmul.mubr.f32.gmra.mrb[0].mxu0 %v1188
        %v1302 = vpop.f32.mrb[0].mxu0
        %v1303 = vadd.f32 0.0, %v1302
        %v1304 = vpop.f32.mrb[0].mxu0
        %1305 = vmatprep.mubr.f32.mxu0 0.0
        %1306 = vmatmul.mubr.f32.gmra.mrb[0].mxu0 %v1189
        %v1307 = vpop.f32.mrb[0].mxu0
        %v1308 = vadd.f32 0.0, %v1307
        %v1309 = vpop.f32.mrb[0].mxu0
        %1310 = vmatprep.mubr.f32.mxu0 0.0
        %1311 = vmatmul.mubr.f32.gmra.mrb[0].mxu0 %v1190
        %v1312 = vpop.f32.mrb[0].mxu0
        %v1313 = vadd.f32 0.0, %v1312
        %v1314 = vpop.f32.mrb[0].mxu0
        %1315 = vmatprep.mubr.f32.mxu0 0.0
        %1316 = vmatmul.mubr.f32.gmra.mrb[0].mxu0 %v1191
        %v1317 = vpop.f32.mrb[0].mxu0
        %v1318 = vadd.f32 0.0, %v1317
        %v1319 = vpop.f32.mrb[0].mxu0
        %1320 = vmatprep.mubr.f32.mxu0 0.0
        %1321 = vmatmul.mubr.f32.gmra.mrb[0].mxu0 %v1192
        %v1322 = vpop.f32.mrb[0].mxu0
        %v1323 = vadd.f32 0.0, %v1322
        %v1324 = vpop.f32.mrb[0].mxu0
        %1325 = vmatprep.mubr.f32.mxu0 0.0
        %1326 = vmatmul.mubr.f32.gmra.mrb[0].mxu0 %v1193
        %v1327 = vpop.f32.mrb[0].mxu0
        %v1328 = vadd.f32 0.0, %v1327
        %v1329 = vpop.f32.mrb[0].mxu0
        %1330 = vmatprep.mubr.f32.mxu0 0.0
        %1331 = vmatmul.mubr.f32.gmra.mrb[0].mxu0 %v1194
        %v1332 = vpop.f32.mrb[0].mxu0
        %v1333 = vadd.f32 0.0, %v1332
        %v1334 = vpop.f32.mrb[0].mxu0
        %1335 = vmatprep.mubr.f32.mxu0 0.0
        %1336 = vmatmul.mubr.f32.gmra.mrb[0].mxu0 %v1195
        %v1337 = vpop.f32.mrb[0].mxu0
        %v1338 = vadd.f32 0.0, %v1337
        %v1339 = vpop.f32.mrb[0].mxu0
        %1340 = vmatprep.mubr.f32.mxu0 0.0
        %1341 = vmatmul.mubr.f32.gmra.mrb[0].mxu0 %v1196
        %v1342 = vpop.f32.mrb[0].mxu0
        %v1343 = vadd.f32 0.0, %v1342
        %v1344 = vpop.f32.mrb[0].mxu0
        %1345 = vmatprep.mubr.f32.mxu0 0.0
        %1346 = vmatmul.mubr.f32.gmra.mrb[0].mxu0 %v1197
        %v1347 = vpop.f32.mrb[0].mxu0
        %v1348 = vadd.f32 0.0, %v1347
        %v1349 = vpop.f32.mrb[0].mxu0
        %1350 = vmatprep.mubr.f32.mxu0 0.0
        %1351 = vmatmul.mubr.f32.gmra.mrb[0].mxu0 %v1198
        %v1352 = vpop.f32.mrb[0].mxu0
        %v1353 = vadd.f32 0.0, %v1352
        %v1354 = vpop.f32.mrb[0].mxu0
        %1355 = vmatprep.mubr.f32.mxu0 0.0
        %1356 = vmatmul.mubr.f32.gmra.mrb[0].mxu0 %v1199
        %v1357 = vpop.f32.mrb[0].mxu0
        %v1358 = vadd.f32 0.0, %v1357
        %v1359 = vpop.f32.mrb[0].mxu0
        %1360 = vdwg.mxu0
        %1361 = vmatprep.subr.mxu0 0.0
        %1362 = vmatpush1.xpose.msra.mxu0 %v1283
        %1363 = vmatprep.subr.mxu0 0.0
        %1364 = vmatpush1.xpose.msra.mxu0 %v1288
        %1365 = vmatprep.subr.mxu0 0.0
        %1366 = vmatpush1.xpose.msra.mxu0 %v1293
        %1367 = vmatprep.subr.mxu0 0.0
        %1368 = vmatpush1.xpose.msra.mxu0 %v1298
        %1369 = vmatprep.subr.mxu0 0.0
        %1370 = vmatpush1.xpose.msra.mxu0 %v1303
        %1371 = vmatprep.subr.mxu0 0.0
        %1372 = vmatpush1.xpose.msra.mxu0 %v1308
        %1373 = vmatprep.subr.mxu0 0.0
        %1374 = vmatpush1.xpose.msra.mxu0 %v1313
        %1375 = vmatprep.subr.mxu0 0.0
        %1376 = vmatpush1.xpose.msra.mxu0 %v1318
        %1377 = vmatprep.subr.mxu0 0.0
        %1378 = vmatpush1.xpose.msra.mxu0 %v1323
        %1379 = vmatprep.subr.mxu0 0.0
        %1380 = vmatpush1.xpose.msra.mxu0 %v1328
        %1381 = vmatprep.subr.mxu0 0.0
        %1382 = vmatpush1.xpose.msra.mxu0 %v1333
        %1383 = vmatprep.subr.mxu0 0.0
        %1384 = vmatpush1.xpose.msra.mxu0 %v1338
        %1385 = vmatprep.subr.mxu0 0.0
        %1386 = vmatpush1.xpose.msra.mxu0 %v1343
        %1387 = vmatprep.subr.mxu0 0.0
        %1388 = vmatpush1.xpose.msra.mxu0 %v1348
        %1389 = vmatprep.subr.mxu0 0.0
        %1390 = vmatpush1.xpose.msra.mxu0 %v1353
        %1391 = vmatprep.subr.mxu0 0.0
        %1392 = vmatpush1.xpose.msra.mxu0 %v1358
        %1393 = vmatprep.subr.mxu0 0.0
        %1394 = vmatpush1.xpose.msra.mxu0 0.0
        %1395 = vmatprep.subr.mxu0 0.0
        %1396 = vmatpush1.xpose.msra.mxu0 0.0
        %1397 = vmatprep.subr.mxu0 0.0
        %1398 = vmatpush1.xpose.msra.mxu0 0.0
        %1399 = vmatprep.subr.mxu0 0.0
        %1400 = vmatpush1.xpose.msra.mxu0 0.0
        %1401 = vmatprep.subr.mxu0 0.0
        %1402 = vmatpush1.xpose.msra.mxu0 0.0
        %1403 = vmatprep.subr.mxu0 0.0
        %1404 = vmatpush1.xpose.msra.mxu0 0.0
        %1405 = vmatprep.subr.mxu0 0.0
        %1406 = vmatpush1.xpose.msra.mxu0 0.0
        %1407 = vmatprep.subr.mxu0 0.0
        %1408 = vmatpush1.xpose.msra.mxu0 0.0
        %1409 = vmatprep.subr.mxu0 0.0
        %1410 = vmatpush1.xpose.msra.mxu0 0.0
        %1411 = vmatprep.subr.mxu0 0.0
        %1412 = vmatpush1.xpose.msra.mxu0 0.0
        %1413 = vmatprep.subr.mxu0 0.0
        %1414 = vmatpush1.xpose.msra.mxu0 0.0
        %1415 = vmatprep.subr.mxu0 0.0
        %1416 = vmatpush1.xpose.msra.mxu0 0.0
        %1417 = vmatprep.subr.mxu0 0.0
        %1418 = vmatpush1.xpose.msra.mxu0 0.0
        %1419 = vmatprep.subr.mxu0 0.0
        %1420 = vmatpush1.xpose.msra.mxu0 0.0
        %1421 = vmatprep.subr.mxu0 0.0
        %1422 = vmatpush1.xpose.msra.mxu0 0.0
        %1423 = vmatprep.subr.mxu0 0.0
        %1424 = vmatpush1.xpose.msra.mxu0 0.0
        %1425 = vmatprep.mubr.f32.mxu0 0.0
        %1426 = vmatmul.mubr.f32.gmra.mrb[0].mxu0 %v391
        %v1427 = vpop.f32.mrb[0].mxu0
        %v1428 = vadd.f32 0.0, %v1427
        %v1429 = vpop.f32.mrb[0].mxu0
        %1430 = vdwg.mxu0
        %1432 = vset.pattern.permute.xlu0 127
        %1433 = vperm.xlu0 %1432, %v1283
        %v1434 = vpop.permute.xlu0 %1433
        %1437 = vset.pattern.permute.xlu0 127
        %1438 = vperm.xlu0 %1437, %v1288
        %v1439 = vpop.permute.xlu0 %1438
        %1442 = vset.pattern.permute.xlu0 127
        %1443 = vperm.xlu0 %1442, %v1293
        %v1444 = vpop.permute.xlu0 %1443
        %1447 = vset.pattern.permute.xlu0 127
        %1448 = vperm.xlu0 %1447, %v1298
        %v1449 = vpop.permute.xlu0 %1448
        %1452 = vset.pattern.permute.xlu0 127
        %1453 = vperm.xlu0 %1452, %v1303
        %v1454 = vpop.permute.xlu0 %1453
        %1457 = vset.pattern.permute.xlu0 127
        %1458 = vperm.xlu0 %1457, %v1308
        %v1459 = vpop.permute.xlu0 %1458
        %1462 = vset.pattern.permute.xlu0 127
        %1463 = vperm.xlu0 %1462, %v1313
        %v1464 = vpop.permute.xlu0 %1463
        %1467 = vset.pattern.permute.xlu0 127
        %1468 = vperm.xlu0 %1467, %v1318
        %v1469 = vpop.permute.xlu0 %1468
        %1472 = vset.pattern.permute.xlu0 127
        %1473 = vperm.xlu0 %1472, %v1323
        %v1474 = vpop.permute.xlu0 %1473
        %1477 = vset.pattern.permute.xlu0 127
        %1478 = vperm.xlu0 %1477, %v1328
        %v1479 = vpop.permute.xlu0 %1478
        %1482 = vset.pattern.permute.xlu0 127
        %1483 = vperm.xlu0 %1482, %v1333
        %v1484 = vpop.permute.xlu0 %1483
        %1487 = vset.pattern.permute.xlu0 127
        %1488 = vperm.xlu0 %1487, %v1338
        %v1489 = vpop.permute.xlu0 %1488
        %1492 = vset.pattern.permute.xlu0 127
        %1493 = vperm.xlu0 %1492, %v1343
        %v1494 = vpop.permute.xlu0 %1493
        %1497 = vset.pattern.permute.xlu0 127
        %1498 = vperm.xlu0 %1497, %v1348
        %v1499 = vpop.permute.xlu0 %1498
        %1502 = vset.pattern.permute.xlu0 127
        %1503 = vperm.xlu0 %1502, %v1353
        %v1504 = vpop.permute.xlu0 %1503
        %1507 = vset.pattern.permute.xlu0 127
        %1508 = vperm.xlu0 %1507, %v1358
        %v1509 = vpop.permute.xlu0 %1508
        %v1511 = vlaneseq
        %v1512 = vshrl.u32 %v1511, 7
        %v1513 = vsub.s32 0, %v1512
        %v1514 = vrot.slane %v1428, %v1513
        %v1515 = vadd.f32 %v1434, %v1514
        %v1516 = vadd.f32 %v1439, %v1514
        %v1517 = vadd.f32 %v1444, %v1514
        %v1518 = vadd.f32 %v1449, %v1514
        %v1519 = vadd.f32 %v1454, %v1514
        %v1520 = vadd.f32 %v1459, %v1514
        %v1521 = vadd.f32 %v1464, %v1514
        %v1522 = vadd.f32 %v1469, %v1514
        %v1523 = vadd.f32 %v1474, %v1514
        %v1524 = vadd.f32 %v1479, %v1514
        %v1525 = vadd.f32 %v1484, %v1514
        %v1526 = vadd.f32 %v1489, %v1514
        %v1527 = vadd.f32 %v1494, %v1514
        %v1528 = vadd.f32 %v1499, %v1514
        %v1529 = vadd.f32 %v1504, %v1514
        %v1530 = vadd.f32 %v1509, %v1514
        %v1531 = vmul.f32 %v1515, 0.2
        %v1532 = vmul.f32 %v1516, 0.2
        %v1533 = vmul.f32 %v1517, 0.2
        %v1534 = vmul.f32 %v1518, 0.2
        %v1535 = vmul.f32 %v1519, 0.2
        %v1536 = vmul.f32 %v1520, 0.2
        %v1537 = vmul.f32 %v1521, 0.2
        %v1538 = vmul.f32 %v1522, 0.2
        %v1539 = vmul.f32 %v1523, 0.2
        %v1540 = vmul.f32 %v1524, 0.2
        %v1541 = vmul.f32 %v1525, 0.2
        %v1542 = vmul.f32 %v1526, 0.2
        %v1543 = vmul.f32 %v1527, 0.2
        %v1544 = vmul.f32 %v1528, 0.2
        %v1545 = vmul.f32 %v1529, 0.2
        %v1546 = vmul.f32 %v1530, 0.2
        %v1547 = vmax.f32 %v1515, %v1531
        %v1548 = vmax.f32 %v1516, %v1532
        %v1549 = vmax.f32 %v1517, %v1533
        %v1550 = vmax.f32 %v1518, %v1534
        %v1551 = vmax.f32 %v1519, %v1535
        %v1552 = vmax.f32 %v1520, %v1536
        %v1553 = vmax.f32 %v1521, %v1537
        %v1554 = vmax.f32 %v1522, %v1538
        %v1555 = vmax.f32 %v1523, %v1539
        %v1556 = vmax.f32 %v1524, %v1540
        %v1557 = vmax.f32 %v1525, %v1541
        %v1558 = vmax.f32 %v1526, %v1542
        %v1559 = vmax.f32 %v1527, %v1543
        %v1560 = vmax.f32 %v1528, %v1544
        %v1561 = vmax.f32 %v1529, %v1545
        %v1562 = vmax.f32 %v1530, %v1546
        %v1563 = vadd.f32 %v1547, %v357
        %v1564 = vadd.f32 %v1548, %v358
        %v1565 = vadd.f32 %v1549, %v359
        %v1566 = vadd.f32 %v1550, %v360
        %v1567 = vadd.f32 %v1551, %v361
        %v1568 = vadd.f32 %v1552, %v362
        %v1569 = vadd.f32 %v1553, %v363
        %v1570 = vadd.f32 %v1554, %v364
        %v1571 = vadd.f32 %v1555, %v365
        %v1572 = vadd.f32 %v1556, %v366
        %v1573 = vadd.f32 %v1557, %v367
        %v1574 = vadd.f32 %v1558, %v368
        %v1575 = vadd.f32 %v1559, %v369
        %v1576 = vadd.f32 %v1560, %v370
        %v1577 = vadd.f32 %v1561, %v371
        %v1578 = vadd.f32 %v1562, %v372
        %1579 = vmax.xlane.f32.xlu0 %v1563
        %v1580 = vpop.xlane.xlu0 %1579
        %1581 = vmax.xlane.f32.xlu0 %v1564
        %v1582 = vpop.xlane.xlu0 %1581
        %1583 = vmax.xlane.f32.xlu0 %v1565
        %v1584 = vpop.xlane.xlu0 %1583
        %1585 = vmax.xlane.f32.xlu0 %v1566
        %v1586 = vpop.xlane.xlu0 %1585
        %1587 = vmax.xlane.f32.xlu0 %v1567
        %v1588 = vpop.xlane.xlu0 %1587
        %1589 = vmax.xlane.f32.xlu0 %v1568
        %v1590 = vpop.xlane.xlu0 %1589
        %1591 = vmax.xlane.f32.xlu0 %v1569
        %v1592 = vpop.xlane.xlu0 %1591
        %1593 = vmax.xlane.f32.xlu0 %v1570
        %v1594 = vpop.xlane.xlu0 %1593
        %1595 = vmax.xlane.f32.xlu0 %v1571
        %v1596 = vpop.xlane.xlu0 %1595
        %1597 = vmax.xlane.f32.xlu0 %v1572
        %v1598 = vpop.xlane.xlu0 %1597
        %1599 = vmax.xlane.f32.xlu0 %v1573
        %v1600 = vpop.xlane.xlu0 %1599
        %1601 = vmax.xlane.f32.xlu0 %v1574
        %v1602 = vpop.xlane.xlu0 %1601
        %1603 = vmax.xlane.f32.xlu0 %v1575
        %v1604 = vpop.xlane.xlu0 %1603
        %1605 = vmax.xlane.f32.xlu0 %v1576
        %v1606 = vpop.xlane.xlu0 %1605
        %1607 = vmax.xlane.f32.xlu0 %v1577
        %v1608 = vpop.xlane.xlu0 %1607
        %1609 = vmax.xlane.f32.xlu0 %v1578
        %v1610 = vpop.xlane.xlu0 %1609
        %v1611 = vsub.f32 %v1563, %v1580
        %v1612 = vsub.f32 %v1564, %v1582
        %v1613 = vsub.f32 %v1565, %v1584
        %v1614 = vsub.f32 %v1566, %v1586
        %v1615 = vsub.f32 %v1567, %v1588
        %v1616 = vsub.f32 %v1568, %v1590
        %v1617 = vsub.f32 %v1569, %v1592
        %v1618 = vsub.f32 %v1570, %v1594
        %v1619 = vsub.f32 %v1571, %v1596
        %v1620 = vsub.f32 %v1572, %v1598
        %v1621 = vsub.f32 %v1573, %v1600
        %v1622 = vsub.f32 %v1574, %v1602
        %v1623 = vsub.f32 %v1575, %v1604
        %v1624 = vsub.f32 %v1576, %v1606
        %v1625 = vsub.f32 %v1577, %v1608
        %v1626 = vsub.f32 %v1578, %v1610
        %v1627 = vmul.f32 %v1611, 1.442695
        %v1628 = vpow.pop %v1627
        %v1629 = vmul.f32 %v1612, 1.442695
        %v1630 = vpow.pop %v1629
        %v1631 = vmul.f32 %v1613, 1.442695
        %v1632 = vpow.pop %v1631
        %v1633 = vmul.f32 %v1614, 1.442695
        %v1634 = vpow.pop %v1633
        %v1635 = vmul.f32 %v1615, 1.442695
        %v1636 = vpow.pop %v1635
        %v1637 = vmul.f32 %v1616, 1.442695
        %v1638 = vpow.pop %v1637
        %v1639 = vmul.f32 %v1617, 1.442695
        %v1640 = vpow.pop %v1639
        %v1641 = vmul.f32 %v1618, 1.442695
        %v1642 = vpow.pop %v1641
        %v1643 = vmul.f32 %v1619, 1.442695
        %v1644 = vpow.pop %v1643
        %v1645 = vmul.f32 %v1620, 1.442695
        %v1646 = vpow.pop %v1645
        %v1647 = vmul.f32 %v1621, 1.442695
        %v1648 = vpow.pop %v1647
        %v1649 = vmul.f32 %v1622, 1.442695
        %v1650 = vpow.pop %v1649
        %v1651 = vmul.f32 %v1623, 1.442695
        %v1652 = vpow.pop %v1651
        %v1653 = vmul.f32 %v1624, 1.442695
        %v1654 = vpow.pop %v1653
        %v1655 = vmul.f32 %v1625, 1.442695
        %v1656 = vpow.pop %v1655
        %v1657 = vmul.f32 %v1626, 1.442695
        %v1658 = vpow.pop %v1657
        %1659 = vadd.xlane.f32.xlu0 %v1628
        %v1660 = vpop.xlane.xlu0 %1659
        %1661 = vadd.xlane.f32.xlu0 %v1630
        %v1662 = vpop.xlane.xlu0 %1661
        %1663 = vadd.xlane.f32.xlu0 %v1632
        %v1664 = vpop.xlane.xlu0 %1663
        %1665 = vadd.xlane.f32.xlu0 %v1634
        %v1666 = vpop.xlane.xlu0 %1665
        %1667 = vadd.xlane.f32.xlu0 %v1636
        %v1668 = vpop.xlane.xlu0 %1667
        %1669 = vadd.xlane.f32.xlu0 %v1638
        %v1670 = vpop.xlane.xlu0 %1669
        %1671 = vadd.xlane.f32.xlu0 %v1640
        %v1672 = vpop.xlane.xlu0 %1671
        %1673 = vadd.xlane.f32.xlu0 %v1642
        %v1674 = vpop.xlane.xlu0 %1673
        %1675 = vadd.xlane.f32.xlu0 %v1644
        %v1676 = vpop.xlane.xlu0 %1675
        %1677 = vadd.xlane.f32.xlu0 %v1646
        %v1678 = vpop.xlane.xlu0 %1677
        %1679 = vadd.xlane.f32.xlu0 %v1648
        %v1680 = vpop.xlane.xlu0 %1679
        %1681 = vadd.xlane.f32.xlu0 %v1650
        %v1682 = vpop.xlane.xlu0 %1681
        %1683 = vadd.xlane.f32.xlu0 %v1652
        %v1684 = vpop.xlane.xlu0 %1683
        %1685 = vadd.xlane.f32.xlu0 %v1654
        %v1686 = vpop.xlane.xlu0 %1685
        %1687 = vadd.xlane.f32.xlu0 %v1656
        %v1688 = vpop.xlane.xlu0 %1687
        %1689 = vadd.xlane.f32.xlu0 %v1658
        %v1690 = vpop.xlane.xlu0 %1689
        %v1691 = vrcp.pop %v1660
        %v1692 = vmul.f32 %v373, %v1691
        %v1693 = vrcp.pop %v1662
        %v1694 = vmul.f32 %v374, %v1693
        %v1695 = vrcp.pop %v1664
        %v1696 = vmul.f32 %v375, %v1695
        %v1697 = vrcp.pop %v1666
        %v1698 = vmul.f32 %v376, %v1697
        %v1699 = vrcp.pop %v1668
        %v1700 = vmul.f32 %v377, %v1699
        %v1701 = vrcp.pop %v1670
        %v1702 = vmul.f32 %v378, %v1701
        %v1703 = vrcp.pop %v1672
        %v1704 = vmul.f32 %v379, %v1703
        %v1705 = vrcp.pop %v1674
        %v1706 = vmul.f32 %v380, %v1705
        %v1707 = vrcp.pop %v1676
        %v1708 = vmul.f32 %v381, %v1707
        %v1709 = vrcp.pop %v1678
        %v1710 = vmul.f32 %v382, %v1709
        %v1711 = vrcp.pop %v1680
        %v1712 = vmul.f32 %v383, %v1711
        %v1713 = vrcp.pop %v1682
        %v1714 = vmul.f32 %v384, %v1713
        %v1715 = vrcp.pop %v1684
        %v1716 = vmul.f32 %v385, %v1715
        %v1717 = vrcp.pop %v1686
        %v1718 = vmul.f32 %v386, %v1717
        %v1719 = vrcp.pop %v1688
        %v1720 = vmul.f32 %v387, %v1719
        %v1721 = vrcp.pop %v1690
        %v1722 = vmul.f32 %v388, %v1721
        %v1723 = vpack.c.bf16 %v1630, %v1628
        %v1724 = vpack.c.bf16 %v1634, %v1632
        %v1725 = vpack.c.bf16 %v1638, %v1636
        %v1726 = vpack.c.bf16 %v1642, %v1640
        %v1727 = vpack.c.bf16 %v1646, %v1644
        %v1728 = vpack.c.bf16 %v1650, %v1648
        %v1729 = vpack.c.bf16 %v1654, %v1652
        %v1730 = vpack.c.bf16 %v1658, %v1656
        %v1731 = vpack.c.bf16 %v1288, %v1283
        %v1732 = vpack.c.bf16 %v1298, %v1293
        %v1733 = vpack.c.bf16 %v1308, %v1303
        %v1734 = vpack.c.bf16 %v1318, %v1313
        %v1735 = vpack.c.bf16 %v1328, %v1323
        %v1736 = vpack.c.bf16 %v1338, %v1333
        %v1737 = vpack.c.bf16 %v1348, %v1343
        %v1738 = vpack.c.bf16 %v1358, %v1353
        %1739 = vmatprep.subr.bf16.mxu0 0
        %1740 = vmatpush1.bf16.msra.mxu0 %v1731
        %1741 = vmatprep.subr.bf16.mxu0 0
        %1742 = vmatpush1.bf16.msra.mxu0 %v1732
        %1743 = vmatprep.subr.bf16.mxu0 0
        %1744 = vmatpush1.bf16.msra.mxu0 %v1733
        %1745 = vmatprep.subr.bf16.mxu0 0
        %1746 = vmatpush1.bf16.msra.mxu0 %v1734
        %1747 = vmatprep.subr.bf16.mxu0 0
        %1748 = vmatpush1.bf16.msra.mxu0 %v1735
        %1749 = vmatprep.subr.bf16.mxu0 0
        %1750 = vmatpush1.bf16.msra.mxu0 %v1736
        %1751 = vmatprep.subr.bf16.mxu0 0
        %1752 = vmatpush1.bf16.msra.mxu0 %v1737
        %1753 = vmatprep.subr.bf16.mxu0 0
        %1754 = vmatpush1.bf16.msra.mxu0 %v1738
        %1755 = vmatprep.subr.bf16.mxu0 0
        %1756 = vmatpush1.bf16.msra.mxu0 0
        %1757 = vmatprep.subr.bf16.mxu0 0
        %1758 = vmatpush1.bf16.msra.mxu0 0
        %1759 = vmatprep.subr.bf16.mxu0 0
        %1760 = vmatpush1.bf16.msra.mxu0 0
        %1761 = vmatprep.subr.bf16.mxu0 0
        %1762 = vmatpush1.bf16.msra.mxu0 0
        %1763 = vmatprep.subr.bf16.mxu0 0
        %1764 = vmatpush1.bf16.msra.mxu0 0
        %1765 = vmatprep.subr.bf16.mxu0 0
        %1766 = vmatpush1.bf16.msra.mxu0 0
        %1767 = vmatprep.subr.bf16.mxu0 0
        %1768 = vmatpush1.bf16.msra.mxu0 0
        %1769 = vmatprep.subr.bf16.mxu0 0
        %1770 = vmatpush1.bf16.msra.mxu0 0
        %1771 = vmatprep.mubr.bf16.mxu0 0
        %1772 = vmatmul.mubr.bf16.gmra.mrb[0].mxu0 %v1723
        %v1773 = vpop.f32.mrb[0].mxu0
        %v1774 = vadd.f32 0.0, %v1773
        %v1775 = vpop.f32.mrb[0].mxu0
        %v1776 = vpop.f32.mrb[0].mxu0
        %v1777 = vadd.f32 0.0, %v1776
        %v1778 = vpop.f32.mrb[0].mxu0
        %1779 = vmatprep.mubr.bf16.mxu0 0
        %1780 = vmatmul.mubr.bf16.gmra.mrb[0].mxu0 %v1724
        %v1781 = vpop.f32.mrb[0].mxu0
        %v1782 = vadd.f32 0.0, %v1781
        %v1783 = vpop.f32.mrb[0].mxu0
        %v1784 = vpop.f32.mrb[0].mxu0
        %v1785 = vadd.f32 0.0, %v1784
        %v1786 = vpop.f32.mrb[0].mxu0
        %1787 = vmatprep.mubr.bf16.mxu0 0
        %1788 = vmatmul.mubr.bf16.gmra.mrb[0].mxu0 %v1725
        %v1789 = vpop.f32.mrb[0].mxu0
        %v1790 = vadd.f32 0.0, %v1789
        %v1791 = vpop.f32.mrb[0].mxu0
        %v1792 = vpop.f32.mrb[0].mxu0
        %v1793 = vadd.f32 0.0, %v1792
        %v1794 = vpop.f32.mrb[0].mxu0
        %1795 = vmatprep.mubr.bf16.mxu0 0
        %1796 = vmatmul.mubr.bf16.gmra.mrb[0].mxu0 %v1726
        %v1797 = vpop.f32.mrb[0].mxu0
        %v1798 = vadd.f32 0.0, %v1797
        %v1799 = vpop.f32.mrb[0].mxu0
        %v1800 = vpop.f32.mrb[0].mxu0
        %v1801 = vadd.f32 0.0, %v1800
        %v1802 = vpop.f32.mrb[0].mxu0
        %1803 = vmatprep.mubr.bf16.mxu0 0
        %1804 = vmatmul.mubr.bf16.gmra.mrb[0].mxu0 %v1727
        %v1805 = vpop.f32.mrb[0].mxu0
        %v1806 = vadd.f32 0.0, %v1805
        %v1807 = vpop.f32.mrb[0].mxu0
        %v1808 = vpop.f32.mrb[0].mxu0
        %v1809 = vadd.f32 0.0, %v1808
        %v1810 = vpop.f32.mrb[0].mxu0
        %1811 = vmatprep.mubr.bf16.mxu0 0
        %1812 = vmatmul.mubr.bf16.gmra.mrb[0].mxu0 %v1728
        %v1813 = vpop.f32.mrb[0].mxu0
        %v1814 = vadd.f32 0.0, %v1813
        %v1815 = vpop.f32.mrb[0].mxu0
        %v1816 = vpop.f32.mrb[0].mxu0
        %v1817 = vadd.f32 0.0, %v1816
        %v1818 = vpop.f32.mrb[0].mxu0
        %1819 = vmatprep.mubr.bf16.mxu0 0
        %1820 = vmatmul.mubr.bf16.gmra.mrb[0].mxu0 %v1729
        %v1821 = vpop.f32.mrb[0].mxu0
        %v1822 = vadd.f32 0.0, %v1821
        %v1823 = vpop.f32.mrb[0].mxu0
        %v1824 = vpop.f32.mrb[0].mxu0
        %v1825 = vadd.f32 0.0, %v1824
        %v1826 = vpop.f32.mrb[0].mxu0
        %1827 = vmatprep.mubr.bf16.mxu0 0
        %1828 = vmatmul.mubr.bf16.gmra.mrb[0].mxu0 %v1730
        %v1829 = vpop.f32.mrb[0].mxu0
        %v1830 = vadd.f32 0.0, %v1829
        %v1831 = vpop.f32.mrb[0].mxu0
        %v1832 = vpop.f32.mrb[0].mxu0
        %v1833 = vadd.f32 0.0, %v1832
        %v1834 = vpop.f32.mrb[0].mxu0
        %1835 = vdwg.mxu0
        %1837 = vset.pattern.permute.xlu0 0
        %1838 = vperm.xlu0 %1837, %v1692
        %v1839 = vpop.permute.xlu0 %1838
        %1842 = vset.pattern.permute.xlu0 0
        %1843 = vperm.xlu0 %1842, %v1694
        %v1844 = vpop.permute.xlu0 %1843
        %1847 = vset.pattern.permute.xlu0 0
        %1848 = vperm.xlu0 %1847, %v1696
        %v1849 = vpop.permute.xlu0 %1848
        %1852 = vset.pattern.permute.xlu0 0
        %1853 = vperm.xlu0 %1852, %v1698
        %v1854 = vpop.permute.xlu0 %1853
        %1857 = vset.pattern.permute.xlu0 0
        %1858 = vperm.xlu0 %1857, %v1700
        %v1859 = vpop.permute.xlu0 %1858
        %1862 = vset.pattern.permute.xlu0 0
        %1863 = vperm.xlu0 %1862, %v1702
        %v1864 = vpop.permute.xlu0 %1863
        %1867 = vset.pattern.permute.xlu0 0
        %1868 = vperm.xlu0 %1867, %v1704
        %v1869 = vpop.permute.xlu0 %1868
        %1872 = vset.pattern.permute.xlu0 0
        %1873 = vperm.xlu0 %1872, %v1706
        %v1874 = vpop.permute.xlu0 %1873
        %1877 = vset.pattern.permute.xlu0 0
        %1878 = vperm.xlu0 %1877, %v1708
        %v1879 = vpop.permute.xlu0 %1878
        %1882 = vset.pattern.permute.xlu0 0
        %1883 = vperm.xlu0 %1882, %v1710
        %v1884 = vpop.permute.xlu0 %1883
        %1887 = vset.pattern.permute.xlu0 0
        %1888 = vperm.xlu0 %1887, %v1712
        %v1889 = vpop.permute.xlu0 %1888
        %1892 = vset.pattern.permute.xlu0 0
        %1893 = vperm.xlu0 %1892, %v1714
        %v1894 = vpop.permute.xlu0 %1893
        %1897 = vset.pattern.permute.xlu0 0
        %1898 = vperm.xlu0 %1897, %v1716
        %v1899 = vpop.permute.xlu0 %1898
        %1902 = vset.pattern.permute.xlu0 0
        %1903 = vperm.xlu0 %1902, %v1718
        %v1904 = vpop.permute.xlu0 %1903
        %1907 = vset.pattern.permute.xlu0 0
        %1908 = vperm.xlu0 %1907, %v1720
        %v1909 = vpop.permute.xlu0 %1908
        %1912 = vset.pattern.permute.xlu0 0
        %1913 = vperm.xlu0 %1912, %v1722
        %v1914 = vpop.permute.xlu0 %1913
        %v1916 = vmul.f32 %v1774, %v1839
        %v1917 = vmul.f32 %v1777, %v1844
        %v1918 = vmul.f32 %v1782, %v1849
        %v1919 = vmul.f32 %v1785, %v1854
        %v1920 = vmul.f32 %v1790, %v1859
        %v1921 = vmul.f32 %v1793, %v1864
        %v1922 = vmul.f32 %v1798, %v1869
        %v1923 = vmul.f32 %v1801, %v1874
        %v1924 = vmul.f32 %v1806, %v1879
        %v1925 = vmul.f32 %v1809, %v1884
        %v1926 = vmul.f32 %v1814, %v1889
        %v1927 = vmul.f32 %v1817, %v1894
        %v1928 = vmul.f32 %v1822, %v1899
        %v1929 = vmul.f32 %v1825, %v1904
        %v1930 = vmul.f32 %v1830, %v1909
        %v1931 = vmul.f32 %v1833, %v1914
        %v1932 = vlaneseq
        %v1933 = vshrl.u32 %v1932, 7
        %v1934 = vsub.s32 0, %v1933
        %v1935 = vrot.slane %v392, %v1934
        %v1936 = vadd.f32 %v1916, %v1935
        %v1937 = vadd.f32 %v1917, %v1935
        %v1938 = vadd.f32 %v1918, %v1935
        %v1939 = vadd.f32 %v1919, %v1935
        %v1940 = vadd.f32 %v1920, %v1935
        %v1941 = vadd.f32 %v1921, %v1935
        %v1942 = vadd.f32 %v1922, %v1935
        %v1943 = vadd.f32 %v1923, %v1935
        %v1944 = vadd.f32 %v1924, %v1935
        %v1945 = vadd.f32 %v1925, %v1935
        %v1946 = vadd.f32 %v1926, %v1935
        %v1947 = vadd.f32 %v1927, %v1935
        %v1948 = vadd.f32 %v1928, %v1935
        %v1949 = vadd.f32 %v1929, %v1935
        %v1950 = vadd.f32 %v1930, %v1935
        %v1951 = vadd.f32 %v1931, %v1935
        %v1952 = vmax.f32 %v1936, 0.0
        %v1953 = vmax.f32 %v1937, 0.0
        %v1954 = vmax.f32 %v1938, 0.0
        %v1955 = vmax.f32 %v1939, 0.0
        %v1956 = vmax.f32 %v1940, 0.0
        %v1957 = vmax.f32 %v1941, 0.0
        %v1958 = vmax.f32 %v1942, 0.0
        %v1959 = vmax.f32 %v1943, 0.0
        %v1960 = vmax.f32 %v1944, 0.0
        %v1961 = vmax.f32 %v1945, 0.0
        %v1962 = vmax.f32 %v1946, 0.0
        %v1963 = vmax.f32 %v1947, 0.0
        %v1964 = vmax.f32 %v1948, 0.0
        %v1965 = vmax.f32 %v1949, 0.0
        %v1966 = vmax.f32 %v1950, 0.0
        %v1967 = vmax.f32 %v1951, 0.0
        %v1968 = vld [vmem:[%s5] sm:$0xff]
        %v1969 = vld [vmem:[%s5 + $0x8] sm:$0xff]
        %v1970 = vld [vmem:[%s5 + $0x10] sm:$0xff]
        %v1971 = vld [vmem:[%s5 + $0x18] sm:$0xff]
        %v1972 = vld [vmem:[%s5 + $0x20] sm:$0xff]
        %v1973 = vld [vmem:[%s5 + $0x28] sm:$0xff]
        %v1974 = vld [vmem:[%s5 + $0x30] sm:$0xff]
        %v1975 = vld [vmem:[%s5 + $0x38] sm:$0xff]
        %v1976 = vld [vmem:[%s5 + $0x40] sm:$0xff]
        %v1977 = vld [vmem:[%s5 + $0x48] sm:$0xff]
        %v1978 = vld [vmem:[%s5 + $0x50] sm:$0xff]
        %v1979 = vld [vmem:[%s5 + $0x58] sm:$0xff]
        %v1980 = vld [vmem:[%s5 + $0x60] sm:$0xff]
        %v1981 = vld [vmem:[%s5 + $0x68] sm:$0xff]
        %v1982 = vld [vmem:[%s5 + $0x70] sm:$0xff]
        %v1983 = vld [vmem:[%s5 + $0x78] sm:$0xff]
        %v1984 = vlaneseq
        %v1985 = vshrl.u32 %v1984, 7
        %v1986 = vsub.s32 0, %v1985
        %v1987 = vrot.slane %v393, %v1986
        %1988 = vmatprep.subr.mxu0 0.0
        %1989 = vmatpush1.msra.mxu0 %v1968
        %1990 = vmatprep.subr.mxu0 0.0
        %1991 = vmatpush1.msra.mxu0 %v1969
        %1992 = vmatprep.subr.mxu0 0.0
        %1993 = vmatpush1.msra.mxu0 %v1970
        %1994 = vmatprep.subr.mxu0 0.0
        %1995 = vmatpush1.msra.mxu0 %v1971
        %1996 = vmatprep.subr.mxu0 0.0
        %1997 = vmatpush1.msra.mxu0 %v1972
        %1998 = vmatprep.subr.mxu0 0.0
        %1999 = vmatpush1.msra.mxu0 %v1973
        %2000 = vmatprep.subr.mxu0 0.0
        %2001 = vmatpush1.msra.mxu0 %v1974
        %2002 = vmatprep.subr.mxu0 0.0
        %2003 = vmatpush1.msra.mxu0 %v1975
        %2004 = vmatprep.subr.mxu0 0.0
        %2005 = vmatpush1.msra.mxu0 %v1976
        %2006 = vmatprep.subr.mxu0 0.0
        %2007 = vmatpush1.msra.mxu0 %v1977
        %2008 = vmatprep.subr.mxu0 0.0
        %2009 = vmatpush1.msra.mxu0 %v1978
        %2010 = vmatprep.subr.mxu0 0.0
        %2011 = vmatpush1.msra.mxu0 %v1979
        %2012 = vmatprep.subr.mxu0 0.0
        %2013 = vmatpush1.msra.mxu0 %v1980
        %2014 = vmatprep.subr.mxu0 0.0
        %2015 = vmatpush1.msra.mxu0 %v1981
        %2016 = vmatprep.subr.mxu0 0.0
        %2017 = vmatpush1.msra.mxu0 %v1982
        %2018 = vmatprep.subr.mxu0 0.0
        %2019 = vmatpush1.msra.mxu0 %v1983
        %2020 = vmatprep.subr.mxu0 0.0
        %2021 = vmatpush1.msra.mxu0 0.0
        %2022 = vmatprep.subr.mxu0 0.0
        %2023 = vmatpush1.msra.mxu0 0.0
        %2024 = vmatprep.subr.mxu0 0.0
        %2025 = vmatpush1.msra.mxu0 0.0
        %2026 = vmatprep.subr.mxu0 0.0
        %2027 = vmatpush1.msra.mxu0 0.0
        %2028 = vmatprep.subr.mxu0 0.0
        %2029 = vmatpush1.msra.mxu0 0.0
        %2030 = vmatprep.subr.mxu0 0.0
        %2031 = vmatpush1.msra.mxu0 0.0
        %2032 = vmatprep.subr.mxu0 0.0
        %2033 = vmatpush1.msra.mxu0 0.0
        %2034 = vmatprep.subr.mxu0 0.0
        %2035 = vmatpush1.msra.mxu0 0.0
        %2036 = vmatprep.subr.mxu0 0.0
        %2037 = vmatpush1.msra.mxu0 0.0
        %2038 = vmatprep.subr.mxu0 0.0
        %2039 = vmatpush1.msra.mxu0 0.0
        %2040 = vmatprep.subr.mxu0 0.0
        %2041 = vmatpush1.msra.mxu0 0.0
        %2042 = vmatprep.subr.mxu0 0.0
        %2043 = vmatpush1.msra.mxu0 0.0
        %2044 = vmatprep.subr.mxu0 0.0
        %2045 = vmatpush1.msra.mxu0 0.0
        %2046 = vmatprep.subr.mxu0 0.0
        %2047 = vmatpush1.msra.mxu0 0.0
        %2048 = vmatprep.subr.mxu0 0.0
        %2049 = vmatpush1.msra.mxu0 0.0
        %2050 = vmatprep.subr.mxu0 0.0
        %2051 = vmatpush1.msra.mxu0 0.0
        %2052 = vmatprep.mubr.f32.mxu0 0.0
        %2053 = vmatmul.mubr.f32.gmra.mrb[0].mxu0 %v1952
        %v2054 = vpop.f32.mrb[0].mxu0
        %v2055 = vadd.f32 %v1987, %v2054
        %v2056 = vpop.f32.mrb[0].mxu0
        %2057 = vmatprep.mubr.f32.mxu0 0.0
        %2058 = vmatmul.mubr.f32.gmra.mrb[0].mxu0 %v1953
        %v2059 = vpop.f32.mrb[0].mxu0
        %v2060 = vadd.f32 %v1987, %v2059
        %v2061 = vpop.f32.mrb[0].mxu0
        %2062 = vmatprep.mubr.f32.mxu0 0.0
        %2063 = vmatmul.mubr.f32.gmra.mrb[0].mxu0 %v1954
        %v2064 = vpop.f32.mrb[0].mxu0
        %v2065 = vadd.f32 %v1987, %v2064
        %v2066 = vpop.f32.mrb[0].mxu0
        %2067 = vmatprep.mubr.f32.mxu0 0.0
        %2068 = vmatmul.mubr.f32.gmra.mrb[0].mxu0 %v1955
        %v2069 = vpop.f32.mrb[0].mxu0
        %v2070 = vadd.f32 %v1987, %v2069
        %v2071 = vpop.f32.mrb[0].mxu0
        %2072 = vmatprep.mubr.f32.mxu0 0.0
        %2073 = vmatmul.mubr.f32.gmra.mrb[0].mxu0 %v1956
        %v2074 = vpop.f32.mrb[0].mxu0
        %v2075 = vadd.f32 %v1987, %v2074
        %v2076 = vpop.f32.mrb[0].mxu0
        %2077 = vmatprep.mubr.f32.mxu0 0.0
        %2078 = vmatmul.mubr.f32.gmra.mrb[0].mxu0 %v1957
        %v2079 = vpop.f32.mrb[0].mxu0
        %v2080 = vadd.f32 %v1987, %v2079
        %v2081 = vpop.f32.mrb[0].mxu0
        %2082 = vmatprep.mubr.f32.mxu0 0.0
        %2083 = vmatmul.mubr.f32.gmra.mrb[0].mxu0 %v1958
        %v2084 = vpop.f32.mrb[0].mxu0
        %v2085 = vadd.f32 %v1987, %v2084
        %v2086 = vpop.f32.mrb[0].mxu0
        %2087 = vmatprep.mubr.f32.mxu0 0.0
        %2088 = vmatmul.mubr.f32.gmra.mrb[0].mxu0 %v1959
        %v2089 = vpop.f32.mrb[0].mxu0
        %v2090 = vadd.f32 %v1987, %v2089
        %v2091 = vpop.f32.mrb[0].mxu0
        %2092 = vmatprep.mubr.f32.mxu0 0.0
        %2093 = vmatmul.mubr.f32.gmra.mrb[0].mxu0 %v1960
        %v2094 = vpop.f32.mrb[0].mxu0
        %v2095 = vadd.f32 %v1987, %v2094
        %v2096 = vpop.f32.mrb[0].mxu0
        %2097 = vmatprep.mubr.f32.mxu0 0.0
        %2098 = vmatmul.mubr.f32.gmra.mrb[0].mxu0 %v1961
        %v2099 = vpop.f32.mrb[0].mxu0
        %v2100 = vadd.f32 %v1987, %v2099
        %v2101 = vpop.f32.mrb[0].mxu0
        %2102 = vmatprep.mubr.f32.mxu0 0.0
        %2103 = vmatmul.mubr.f32.gmra.mrb[0].mxu0 %v1962
        %v2104 = vpop.f32.mrb[0].mxu0
        %v2105 = vadd.f32 %v1987, %v2104
        %v2106 = vpop.f32.mrb[0].mxu0
        %2107 = vmatprep.mubr.f32.mxu0 0.0
        %2108 = vmatmul.mubr.f32.gmra.mrb[0].mxu0 %v1963
        %v2109 = vpop.f32.mrb[0].mxu0
        %v2110 = vadd.f32 %v1987, %v2109
        %v2111 = vpop.f32.mrb[0].mxu0
        %2112 = vmatprep.mubr.f32.mxu0 0.0
        %2113 = vmatmul.mubr.f32.gmra.mrb[0].mxu0 %v1964
        %v2114 = vpop.f32.mrb[0].mxu0
        %v2115 = vadd.f32 %v1987, %v2114
        %v2116 = vpop.f32.mrb[0].mxu0
        %2117 = vmatprep.mubr.f32.mxu0 0.0
        %2118 = vmatmul.mubr.f32.gmra.mrb[0].mxu0 %v1965
        %v2119 = vpop.f32.mrb[0].mxu0
        %v2120 = vadd.f32 %v1987, %v2119
        %v2121 = vpop.f32.mrb[0].mxu0
        %2122 = vmatprep.mubr.f32.mxu0 0.0
        %2123 = vmatmul.mubr.f32.gmra.mrb[0].mxu0 %v1966
        %v2124 = vpop.f32.mrb[0].mxu0
        %v2125 = vadd.f32 %v1987, %v2124
        %v2126 = vpop.f32.mrb[0].mxu0
        %2127 = vmatprep.mubr.f32.mxu0 0.0
        %2128 = vmatmul.mubr.f32.gmra.mrb[0].mxu0 %v1967
        %v2129 = vpop.f32.mrb[0].mxu0
        %v2130 = vadd.f32 %v1987, %v2129
        %v2131 = vpop.f32.mrb[0].mxu0
        %2132 = vdwg.mxu0
        %v2133 = vmax.f32 %v2055, 0.0
        %v2134 = vmax.f32 %v2060, 0.0
        %v2135 = vmax.f32 %v2065, 0.0
        %v2136 = vmax.f32 %v2070, 0.0
        %v2137 = vmax.f32 %v2075, 0.0
        %v2138 = vmax.f32 %v2080, 0.0
        %v2139 = vmax.f32 %v2085, 0.0
        %v2140 = vmax.f32 %v2090, 0.0
        %v2141 = vmax.f32 %v2095, 0.0
        %v2142 = vmax.f32 %v2100, 0.0
        %v2143 = vmax.f32 %v2105, 0.0
        %v2144 = vmax.f32 %v2110, 0.0
        %v2145 = vmax.f32 %v2115, 0.0
        %v2146 = vmax.f32 %v2120, 0.0
        %v2147 = vmax.f32 %v2125, 0.0
        %v2148 = vmax.f32 %v2130, 0.0
        %2149 = vst [vmem:[%s304] sm:$0xff] %v2133
        %2150 = vst [vmem:[%s304 + $0x8] sm:$0xff] %v2134
        %2151 = vst [vmem:[%s304 + $0x10] sm:$0xff] %v2135
        %2152 = vst [vmem:[%s304 + $0x18] sm:$0xff] %v2136
        %2153 = vst [vmem:[%s304 + $0x20] sm:$0xff] %v2137
        %2154 = vst [vmem:[%s304 + $0x28] sm:$0xff] %v2138
        %2155 = vst [vmem:[%s304 + $0x30] sm:$0xff] %v2139
        %2156 = vst [vmem:[%s304 + $0x38] sm:$0xff] %v2140
        %2157 = vst [vmem:[%s304 + $0x40] sm:$0xff] %v2141
        %2158 = vst [vmem:[%s304 + $0x48] sm:$0xff] %v2142
        %2159 = vst [vmem:[%s304 + $0x50] sm:$0xff] %v2143
        %2160 = vst [vmem:[%s304 + $0x58] sm:$0xff] %v2144
        %2161 = vst [vmem:[%s304 + $0x60] sm:$0xff] %v2145
        %2162 = vst [vmem:[%s304 + $0x68] sm:$0xff] %v2146
        %2163 = vst [vmem:[%s304 + $0x70] sm:$0xff] %v2147
        %2164 = vst [vmem:[%s304 + $0x78] sm:$0xff] %v2148
        %s2165 = sand.u32 %s191, 1
        %s2166 = scalar_lea.sflag [#allocation3], %s2165
        %s2167 = sand.u32 %s191, 1
        %s2168 = smul.addr %s2167, 128
        %s2169 = scalar_lea.vmem [#allocation2], %s2168
        // Predicated region
        $region49: #{tpu_custom_call.1} parent=47 // pred_check
          %p2170 = pneg %p201
        $region50: #{tpu_custom_call.1} parent=47 // pred_check_branch
          %2172 = sbr.rel (%p2170) target = $region52
        $region51: #{tpu_custom_call.1} parent=47 // pred_region
          %s2173 = smul.u32 16, %s21
          %s2175 = ssub.s32 2048, 2048
          %2176 = vsyncadd %s2166, %s2175
          %s2177 = smul.addr %s2173, 128
          %s2178 = scalar_lea.hbm %s7, %s2177
          %s2179 = sshll.u32 %s2169, 4
          %s2180 = int_to_ptr.vmem [resolvable:$true] %s2179
          %2185 = dma.vmem_to_hbm [thread:$0]  %s2180, 2048, %s2178, %s2166, 128, 128, 8
        $region52: #{tpu_custom_call.1} parent=47 // pred_fallthru
          _
      $region48: #{tpu_custom_call.1} parent=5 // pred_fallthru
        _
      %p2186 = scmp.le.s32.totalorder 2, %s16
      // Predicated region
      $region53: #{tpu_custom_call.1} parent=5 // pred_check
        %p2187 = pneg %p2186
      $region54: #{tpu_custom_call.1} parent=5 // pred_check_branch
        %2189 = sbr.rel (%p2187) target = $region56
      $region55: #{tpu_custom_call.1} parent=5 // pred_region
        %s2190 = ssub.s32 %s16, 2
        // Predicated region
        $region57: #{tpu_custom_call.1} parent=55 // pred_check
          %p2191 = pneg %p207
        $region58: #{tpu_custom_call.1} parent=55 // pred_check_branch
          %2193 = sbr.rel (%p2191) target = $region60
        $region59: #{tpu_custom_call.1} parent=55 // pred_region
          %s2194 = sand.u32 %s192, 1
          %s2195 = scalar_lea.sflag [#allocation3], %s2194
          %s2196 = sand.u32 %s192, 1
          %s2197 = smul.addr %s2196, 128
          %s2198 = scalar_lea.vmem [#allocation2], %s2197
          %2199 = dma.done %s2195, 2048
        $region60: #{tpu_custom_call.1} parent=55 // pred_fallthru
          _
      $region56: #{tpu_custom_call.1} parent=5 // pred_fallthru
        _
    $region6: #{tpu_custom_call.1} parent=1 // loop_footer
      %s20 = sadd.s32 1, %s16
    $region7: #{tpu_custom_call.1} parent=1 // loop_footer_branch
      %15 = sbr.rel target = $region3
    $region8: #{tpu_custom_call.1} parent=1 // loop_exit
      _
    %2200 = vsyncpa [#allocation3], 1
    %s2201 = scalar_lea.sflag [#allocation3], 1
    %2202 = vsyncpa %s2201, 1

</llo_original>
